<compile_context>
chip_gen: v6e
topology: v6e:2x2x1
jax: 0.10.0
libtpu: 0.0.40
codegen_flags: <defaults>
</compile_context>

<pallas_src>
import jax
import jax.numpy as jnp
from jax.experimental import pallas as pl
from jax.experimental.pallas import tpu as pltpu


def _make_kernel(b_tile, num_clusters, dim, dense_c):
    K, C = num_clusters, dim

    def kernel(x_ref, aw_ref, ab_ref, w_ref, cent_ref, out_ref):
        # x block: (B_TILE, C, P) in the input's native dtype.
        # aw: (C, 1); ab: (1, 1); w / cent: (K, C); out: (B_TILE, K, C) or (B_TILE, K*C).
        aw = aw_ref[...]
        ab = ab_ref[...]
        w = w_ref[...]
        cent = cent_ref[...]

        for b in range(b_tile):                      # unrolled over the image tile
            x = x_ref[b].astype(jnp.float32)         # (C, P): in-kernel cast from native dtype

            # --- attention heatmap: relu( a_w . relu(x) + a_b ) -> (1, P) ---
            # Tiny C->1 conv kept on the VPU/XLU in exact f32 (it multiplies
            # every downstream term, so keep it out of the reduced-precision MXU).
            hmp = jnp.sum(jnp.maximum(x, 0.0) * aw, axis=0, keepdims=True) + ab
            hmp = jnp.maximum(hmp, 0.0)

            # --- F.normalize(x, p=2, dim=channel), folded with hmp (EUP rsqrt) ---
            ss = jnp.sum(x * x, axis=0, keepdims=True)             # (1, P)
            inv_norm = jax.lax.rsqrt(jnp.maximum(ss, 1e-24))       # == 1/max(||x||,1e-12)
            x_hm = x * (inv_norm * hmp)                            # x_n * hmp  (C, P)

            # --- 1x1 conv (K,C)@(C,P) on the MXU + softmax over clusters ---
            logits = jnp.dot(w, x_hm, preferred_element_type=jnp.float32)   # (K, P)
            e = jnp.exp(logits - jnp.max(logits, axis=0, keepdims=True))
            denom = jnp.sum(e, axis=0, keepdims=True)                       # (1, P)
            # soft_assign * hmp folded; approx reciprocal runs on the EUP slot.
            w2 = e * (pl.reciprocal(denom, approx=True) * hmp)              # (K, P)

            # --- VLAD aggregation: spatial reduction on the MXU.  Written so the
            # transposed operands are the small (K,P) / (C,K) tensors, never the
            # large (C,P) x_hm. ---
            s2 = jnp.sum(w2, axis=1, keepdims=True)                          # (K, 1)
            vx = jnp.dot(x_hm, w2.T, preferred_element_type=jnp.float32).T   # (K, C)
            vlad = vx - cent * s2                                            # (K, C)

            # --- intra-normalization (per cluster, over C) ---
            inv1 = jax.lax.rsqrt(
                jnp.maximum(jnp.sum(vlad * vlad, axis=1, keepdims=True), 1e-24))
            vlad = vlad * inv1
            # --- final L2 normalization over the flattened (K*C) descriptor ---
            tot = jnp.sum(jnp.sum(vlad * vlad, axis=1, keepdims=True),
                          axis=0, keepdims=True)                             # (1, 1)
            vlad = vlad * jax.lax.rsqrt(jnp.maximum(tot, 1e-24))

            if dense_c:
                # C is a multiple of 128 -> rows are already lane-dense.
                out_ref[b] = vlad.astype(out_ref.dtype)
            else:
                # Small C: store into a lane-dense flat (K*C) slab with K static
                # row-stores so the output block / DMA stays dense.
                for k in range(K):
                    out_ref[pl.ds(b, 1), pl.ds(k * C, C)] = (
                        vlad[k:k + 1, :].astype(out_ref.dtype))

    return kernel


def _pick_vmem_limit_bytes():
    """~75% of physical VMEM, clamped to [32 MiB, 96 MiB].
    v5e/v6e (128 MiB physical) -> 96 MiB; v7x (64 MiB physical) -> 48 MiB."""
    try:
        phys = pltpu.get_tpu_info().vmem_capacity_bytes
        return int(min(96 * 2 ** 20, max(32 * 2 ** 20, phys * 3 // 4)))
    except Exception:
        return 48 * 2 ** 20


def atten2netvlad_forward(x_nchw, atten_w, atten_b, conv_weight, centroids):
    """x_nchw: (N, C, H, W) in its NATIVE dtype (f32 or bf16); atten_w: (C,)
    squeezed 1x1 conv C->1 weight; atten_b: scalar bias; conv_weight: (K, C)
    squeezed 1x1 conv C->K weight (no bias, vladv2=False); centroids: (K, C).
    Returns the (N, K*C) VLAD descriptor in f32."""
    N, C, H, W = x_nchw.shape
    K = conv_weight.shape[0]
    P = H * W

    # Free reshape only — no astype, no pad: x streams at its native dtype and the
    # kernel block uses the full (untiled) spatial extent as its lane dimension.
    x = x_nchw.reshape(N, C, P)
    aw = jnp.reshape(atten_w, (C, 1)).astype(jnp.float32)
    ab = jnp.reshape(atten_b, (1, 1)).astype(jnp.float32)
    w = jnp.reshape(conv_weight, (K, C)).astype(jnp.float32)
    cent = jnp.reshape(centroids, (K, C)).astype(jnp.float32)

    vmem_limit = _pick_vmem_limit_bytes()

    # B_TILE: biggest divisor of N such that the double-buffered input block plus
    # the f32 working set stays well inside the generation's VMEM, capped at N//2
    # so grid >= 2 and v7x's two TensorCores both get work on the "parallel" axis.
    per_image_bytes = C * P * jnp.dtype(x.dtype).itemsize
    cap = max(1, min(8, (vmem_limit // 8) // max(per_image_bytes, 1)))
    if N >= 2:
        cap = min(cap, max(1, N // 2))
    b_tile = max(d for d in range(1, cap + 1) if N % d == 0)

    dense_c = (C % 128 == 0)
    if dense_c:
        out_shape = jax.ShapeDtypeStruct((N, K, C), jnp.float32)
        out_spec = pl.BlockSpec((b_tile, K, C), lambda n: (n, 0, 0))
    else:
        out_shape = jax.ShapeDtypeStruct((N, K * C), jnp.float32)
        out_spec = pl.BlockSpec((b_tile, K * C), lambda n: (n, 0))

    out = pl.pallas_call(
        _make_kernel(b_tile, K, C, dense_c),
        out_shape=out_shape,
        grid_spec=pltpu.PrefetchScalarGridSpec(
            num_scalar_prefetch=0,
            grid=(N // b_tile,),
            in_specs=[
                pl.BlockSpec((b_tile, C, P), lambda n: (n, 0, 0)),
                pl.BlockSpec((C, 1), lambda n: (0, 0)),
                pl.BlockSpec((1, 1), lambda n: (0, 0)),
                pl.BlockSpec((K, C), lambda n: (0, 0)),
                pl.BlockSpec((K, C), lambda n: (0, 0)),
            ],
            out_specs=out_spec,
        ),
        compiler_params=pltpu.CompilerParams(
            dimension_semantics=("parallel",),
            vmem_limit_bytes=vmem_limit,
        ),
    )(x, aw, ab, w, cent)
    # TODO(synk): emit bf16 descriptors (out dtype bfloat16) and/or cast the MXU
    # operands to bf16 if the consumer tolerates it; kept f32 to match tolerance.
    return out.reshape(N, K * C)


def _reference_forward(x_nchw, atten_w, atten_b, conv_weight, centroids):
    """Pure-JAX reference mirroring the PyTorch forward (default attention)."""
    N, C, H, W = x_nchw.shape
    P = H * W
    hi = jax.lax.Precision.HIGHEST
    xf = x_nchw.reshape(N, C, P).astype(jnp.float32)
    hmp = jnp.einsum("c,ncp->np", atten_w.astype(jnp.float32),
                     jnp.maximum(xf, 0.0), precision=hi) + atten_b
    hmp = jnp.maximum(hmp, 0.0)                               # (N, P)
    norm = jnp.sqrt(jnp.sum(xf * xf, axis=1, keepdims=True))
    x_n = xf / jnp.maximum(norm, 1e-12)
    x_hm = x_n * hmp[:, None, :]
    logits = jnp.einsum("kc,ncp->nkp", conv_weight.astype(jnp.float32),
                        x_hm, precision=hi)
    sa = jax.nn.softmax(logits, axis=1)                       # (N, K, P)
    w2 = sa * hmp[:, None, :]
    vx = jnp.einsum("nkp,ncp->nkc", w2, x_hm, precision=hi)
    vlad = vx - centroids[None, :, :] * jnp.sum(w2, axis=-1)[:, :, None]
    vlad = vlad / jnp.maximum(
        jnp.linalg.norm(vlad, axis=2, keepdims=True), 1e-12)  # intra-norm
    vlad = vlad.reshape(N, -1)
    vlad = vlad / jnp.maximum(
        jnp.linalg.norm(vlad, axis=1, keepdims=True), 1e-12)  # final L2 norm
    return vlad


if __name__ == "__main__":
    # Small shapes consistent with the module: dim (channels) = 128 (the module's
    # default), num_clusters = 8, spatial 8x8 (P = 64, intentionally NOT a
    # multiple of 128 to exercise the un-padded spatial path), batch 4
    # (-> B_TILE = 2, grid = 2).  x is bf16 to exercise native-dtype streaming.
    N, C, H, W = 4, 128, 8, 8
    K = 8

    key = jax.random.PRNGKey(0)
    kx, kaw, kab, kw, kc = jax.random.split(key, 5)

    x = jax.random.normal(kx, (N, C, H, W), dtype=jnp.float32).astype(jnp.bfloat16)
    bound = 1.0 / (C ** 0.5)
    atten_w = jax.random.uniform(kaw, (C,), jnp.float32, -bound, bound)
    atten_b = jax.random.uniform(kab, (), jnp.float32, -bound, bound)
    conv_weight = jax.random.uniform(kw, (K, C), jnp.float32, -bound, bound)
    centroids = jax.random.uniform(kc, (K, C), jnp.float32, 0.0, 1.0)

    out = atten2netvlad_forward(x, atten_w, atten_b, conv_weight, centroids)
    out = jax.block_until_ready(out)

    ref = _reference_forward(x, atten_w, atten_b, conv_weight, centroids)
    assert out.shape == (N, K * C)
    max_err = float(jnp.max(jnp.abs(out - ref)))
    assert jnp.allclose(out, ref, atol=5e-4, rtol=5e-3), max_err
    print("KERNEL_OK")
</pallas_src>

<mosaic_0001>
module attributes {stable_mosaic.version = 11 : i64} {
  func.func @kernel(%arg0: i32, %arg1: memref<2x128x64xbf16, #tpu.memory_space<vmem>>, %arg2: memref<128x1xf32, #tpu.memory_space<vmem>>, %arg3: memref<1x1xf32, #tpu.memory_space<vmem>>, %arg4: memref<8x128xf32, #tpu.memory_space<vmem>>, %arg5: memref<8x128xf32, #tpu.memory_space<vmem>>, %arg6: memref<2x8x128xf32, #tpu.memory_space<vmem>>) attributes {dimension_semantics = [#tpu.dimension_semantics<parallel>], iteration_bounds = array<i64: 2>, scalar_prefetch = 0 : i64, scratch_operands = 0 : i64, tpu.core_type = #tpu.core_type<tc>, window_params = [{transform_indices = @transform_0, window_bounds = array<i64: 2, 128, 64>}, {pipeline_mode = #tpu.pipeline_mode<synchronous>, transform_indices = @transform_1, window_bounds = array<i64: 128, 1>}, {pipeline_mode = #tpu.pipeline_mode<synchronous>, transform_indices = @transform_2, window_bounds = array<i64: 1, 1>}, {pipeline_mode = #tpu.pipeline_mode<synchronous>, transform_indices = @transform_3, window_bounds = array<i64: 8, 128>}, {pipeline_mode = #tpu.pipeline_mode<synchronous>, transform_indices = @transform_4, window_bounds = array<i64: 8, 128>}, {transform_indices = @transform_5, window_bounds = array<i64: 2, 8, 128>}]} {
    %c0 = arith.constant 0 : index
    %c0_0 = arith.constant 0 : index
    %0 = vector.load %arg2[%c0, %c0_0] : memref<128x1xf32, #tpu.memory_space<vmem>>, vector<128x1xf32>
    %c0_1 = arith.constant 0 : index
    %c0_2 = arith.constant 0 : index
    %1 = vector.load %arg3[%c0_1, %c0_2] : memref<1x1xf32, #tpu.memory_space<vmem>>, vector<1x1xf32>
    %c0_3 = arith.constant 0 : index
    %c0_4 = arith.constant 0 : index
    %2 = vector.load %arg4[%c0_3, %c0_4] : memref<8x128xf32, #tpu.memory_space<vmem>>, vector<8x128xf32>
    %c0_5 = arith.constant 0 : index
    %c0_6 = arith.constant 0 : index
    %3 = vector.load %arg5[%c0_5, %c0_6] : memref<8x128xf32, #tpu.memory_space<vmem>>, vector<8x128xf32>
    %c0_7 = arith.constant 0 : index
    %c0_8 = arith.constant 0 : index
    %c0_9 = arith.constant 0 : index
    %4 = vector.load %arg1[%c0_7, %c0_8, %c0_9] : memref<2x128x64xbf16, #tpu.memory_space<vmem>>, vector<1x128x64xbf16>
    %5 = vector.shape_cast %4 : vector<1x128x64xbf16> to vector<128x64xbf16>
    %6 = arith.extf %5 : vector<128x64xbf16> to vector<128x64xf32>
    %cst = arith.constant 0.000000e+00 : f32
    %7 = vector.broadcast %cst : f32 to vector<128x64xf32>
    %8 = arith.maximumf %6, %7 : vector<128x64xf32>
    %9 = vector.broadcast %0 : vector<128x1xf32> to vector<128x64xf32>
    %10 = arith.mulf %8, %9 : vector<128x64xf32>
    %cst_10 = arith.constant dense<0.000000e+00> : vector<64xf32>
    %11 = vector.multi_reduction <add>, %10, %cst_10 [0] : vector<128x64xf32> to vector<64xf32>
    %12 = vector.shape_cast %11 : vector<64xf32> to vector<1x64xf32>
    %13 = vector.broadcast %1 : vector<1x1xf32> to vector<1x64xf32>
    %14 = arith.addf %12, %13 : vector<1x64xf32>
    %cst_11 = arith.constant 0.000000e+00 : f32
    %15 = vector.broadcast %cst_11 : f32 to vector<1x64xf32>
    %16 = arith.maximumf %14, %15 : vector<1x64xf32>
    %17 = arith.mulf %6, %6 : vector<128x64xf32>
    %cst_12 = arith.constant dense<0.000000e+00> : vector<64xf32>
    %18 = vector.multi_reduction <add>, %17, %cst_12 [0] : vector<128x64xf32> to vector<64xf32>
    %19 = vector.shape_cast %18 : vector<64xf32> to vector<1x64xf32>
    %cst_13 = arith.constant 1.000000e-24 : f32
    %20 = vector.broadcast %cst_13 : f32 to vector<1x64xf32>
    %21 = arith.maximumf %19, %20 : vector<1x64xf32>
    %22 = math.rsqrt %21 : vector<1x64xf32>
    %23 = arith.mulf %22, %16 : vector<1x64xf32>
    %24 = vector.broadcast %23 : vector<1x64xf32> to vector<128x64xf32>
    %25 = arith.mulf %6, %24 : vector<128x64xf32>
    %cst_14 = arith.constant dense<0.000000e+00> : vector<8x64xf32>
    %26 = tpu.matmul %2, %25, %cst_14 {dimension_numbers = #tpu.dot_dimension_numbers<[1], [0], [0], [1], [0, 0, 1, 1], [], []>} : vector<8x128xf32>, vector<128x64xf32>, vector<8x64xf32> -> vector<8x64xf32>
    %cst_15 = arith.constant dense<0xFF800000> : vector<64xf32>
    %27 = vector.multi_reduction <maximumf>, %26, %cst_15 [0] : vector<8x64xf32> to vector<64xf32>
    %28 = vector.shape_cast %27 : vector<64xf32> to vector<1x64xf32>
    %29 = vector.broadcast %28 : vector<1x64xf32> to vector<8x64xf32>
    %30 = arith.subf %26, %29 : vector<8x64xf32>
    %31 = math.exp %30 : vector<8x64xf32>
    %cst_16 = arith.constant dense<0.000000e+00> : vector<64xf32>
    %32 = vector.multi_reduction <add>, %31, %cst_16 [0] : vector<8x64xf32> to vector<64xf32>
    %33 = vector.shape_cast %32 : vector<64xf32> to vector<1x64xf32>
    %34 = tpu.reciprocal %33 {approx = true} : vector<1x64xf32> -> vector<1x64xf32>
    %35 = arith.mulf %34, %16 : vector<1x64xf32>
    %36 = vector.broadcast %35 : vector<1x64xf32> to vector<8x64xf32>
    %37 = arith.mulf %31, %36 : vector<8x64xf32>
    %cst_17 = arith.constant dense<0.000000e+00> : vector<8xf32>
    %38 = vector.multi_reduction <add>, %37, %cst_17 [1] : vector<8x64xf32> to vector<8xf32>
    %39 = vector.shape_cast %38 : vector<8xf32> to vector<8x1xf32>
    %40 = tpu.transpose %37, [1, 0] : vector<8x64xf32> -> vector<64x8xf32>
    %cst_18 = arith.constant dense<0.000000e+00> : vector<128x8xf32>
    %41 = tpu.matmul %25, %40, %cst_18 {dimension_numbers = #tpu.dot_dimension_numbers<[1], [0], [0], [1], [0, 0, 1, 1], [], []>} : vector<128x64xf32>, vector<64x8xf32>, vector<128x8xf32> -> vector<128x8xf32>
    %42 = tpu.transpose %41, [1, 0] : vector<128x8xf32> -> vector<8x128xf32>
    %43 = vector.broadcast %39 : vector<8x1xf32> to vector<8x128xf32>
    %44 = arith.mulf %3, %43 : vector<8x128xf32>
    %45 = arith.subf %42, %44 : vector<8x128xf32>
    %46 = arith.mulf %45, %45 : vector<8x128xf32>
    %cst_19 = arith.constant dense<0.000000e+00> : vector<8xf32>
    %47 = vector.multi_reduction <add>, %46, %cst_19 [1] : vector<8x128xf32> to vector<8xf32>
    %48 = vector.shape_cast %47 : vector<8xf32> to vector<8x1xf32>
    %cst_20 = arith.constant 1.000000e-24 : f32
    %49 = vector.broadcast %cst_20 : f32 to vector<8x1xf32>
    %50 = arith.maximumf %48, %49 : vector<8x1xf32>
    %51 = math.rsqrt %50 : vector<8x1xf32>
    %52 = vector.broadcast %51 : vector<8x1xf32> to vector<8x128xf32>
    %53 = arith.mulf %45, %52 : vector<8x128xf32>
    %54 = arith.mulf %53, %53 : vector<8x128xf32>
    %cst_21 = arith.constant dense<0.000000e+00> : vector<8xf32>
    %55 = vector.multi_reduction <add>, %54, %cst_21 [1] : vector<8x128xf32> to vector<8xf32>
    %56 = vector.shape_cast %55 : vector<8xf32> to vector<8x1xf32>
    %cst_22 = arith.constant dense<0.000000e+00> : vector<1xf32>
    %57 = vector.multi_reduction <add>, %56, %cst_22 [0] : vector<8x1xf32> to vector<1xf32>
    %58 = vector.shape_cast %57 : vector<1xf32> to vector<1x1xf32>
    %cst_23 = arith.constant 1.000000e-24 : f32
    %59 = vector.broadcast %cst_23 : f32 to vector<1x1xf32>
    %60 = arith.maximumf %58, %59 : vector<1x1xf32>
    %61 = math.rsqrt %60 : vector<1x1xf32>
    %62 = vector.broadcast %61 : vector<1x1xf32> to vector<8x128xf32>
    %63 = arith.mulf %53, %62 : vector<8x128xf32>
    %c0_24 = arith.constant 0 : index
    %c0_25 = arith.constant 0 : index
    %c0_26 = arith.constant 0 : index
    %64 = vector.load %arg6[%c0_24, %c0_25, %c0_26] : memref<2x8x128xf32, #tpu.memory_space<vmem>>, vector<1x8x128xf32>
    %65 = vector.shape_cast %64 : vector<1x8x128xf32> to vector<8x128xf32>
    %66 = vector.shape_cast %63 : vector<8x128xf32> to vector<1x8x128xf32>
    tpu.vector_store %arg6[%c0_24, %c0_25, %c0_26], %66 {strides = array<i32>} : memref<2x8x128xf32, #tpu.memory_space<vmem>>, vector<1x8x128xf32>,
    %c1 = arith.constant 1 : index
    %c0_27 = arith.constant 0 : index
    %c0_28 = arith.constant 0 : index
    %67 = vector.load %arg1[%c1, %c0_27, %c0_28] : memref<2x128x64xbf16, #tpu.memory_space<vmem>>, vector<1x128x64xbf16>
    %68 = vector.shape_cast %67 : vector<1x128x64xbf16> to vector<128x64xbf16>
    %69 = arith.extf %68 : vector<128x64xbf16> to vector<128x64xf32>
    %cst_29 = arith.constant 0.000000e+00 : f32
    %70 = vector.broadcast %cst_29 : f32 to vector<128x64xf32>
    %71 = arith.maximumf %69, %70 : vector<128x64xf32>
    %72 = vector.broadcast %0 : vector<128x1xf32> to vector<128x64xf32>
    %73 = arith.mulf %71, %72 : vector<128x64xf32>
    %cst_30 = arith.constant dense<0.000000e+00> : vector<64xf32>
    %74 = vector.multi_reduction <add>, %73, %cst_30 [0] : vector<128x64xf32> to vector<64xf32>
    %75 = vector.shape_cast %74 : vector<64xf32> to vector<1x64xf32>
    %76 = vector.broadcast %1 : vector<1x1xf32> to vector<1x64xf32>
    %77 = arith.addf %75, %76 : vector<1x64xf32>
    %cst_31 = arith.constant 0.000000e+00 : f32
    %78 = vector.broadcast %cst_31 : f32 to vector<1x64xf32>
    %79 = arith.maximumf %77, %78 : vector<1x64xf32>
    %80 = arith.mulf %69, %69 : vector<128x64xf32>
    %cst_32 = arith.constant dense<0.000000e+00> : vector<64xf32>
    %81 = vector.multi_reduction <add>, %80, %cst_32 [0] : vector<128x64xf32> to vector<64xf32>
    %82 = vector.shape_cast %81 : vector<64xf32> to vector<1x64xf32>
    %cst_33 = arith.constant 1.000000e-24 : f32
    %83 = vector.broadcast %cst_33 : f32 to vector<1x64xf32>
    %84 = arith.maximumf %82, %83 : vector<1x64xf32>
    %85 = math.rsqrt %84 : vector<1x64xf32>
    %86 = arith.mulf %85, %79 : vector<1x64xf32>
    %87 = vector.broadcast %86 : vector<1x64xf32> to vector<128x64xf32>
    %88 = arith.mulf %69, %87 : vector<128x64xf32>
    %cst_34 = arith.constant dense<0.000000e+00> : vector<8x64xf32>
    %89 = tpu.matmul %2, %88, %cst_34 {dimension_numbers = #tpu.dot_dimension_numbers<[1], [0], [0], [1], [0, 0, 1, 1], [], []>} : vector<8x128xf32>, vector<128x64xf32>, vector<8x64xf32> -> vector<8x64xf32>
    %cst_35 = arith.constant dense<0xFF800000> : vector<64xf32>
    %90 = vector.multi_reduction <maximumf>, %89, %cst_35 [0] : vector<8x64xf32> to vector<64xf32>
    %91 = vector.shape_cast %90 : vector<64xf32> to vector<1x64xf32>
    %92 = vector.broadcast %91 : vector<1x64xf32> to vector<8x64xf32>
    %93 = arith.subf %89, %92 : vector<8x64xf32>
    %94 = math.exp %93 : vector<8x64xf32>
    %cst_36 = arith.constant dense<0.000000e+00> : vector<64xf32>
    %95 = vector.multi_reduction <add>, %94, %cst_36 [0] : vector<8x64xf32> to vector<64xf32>
    %96 = vector.shape_cast %95 : vector<64xf32> to vector<1x64xf32>
    %97 = tpu.reciprocal %96 {approx = true} : vector<1x64xf32> -> vector<1x64xf32>
    %98 = arith.mulf %97, %79 : vector<1x64xf32>
    %99 = vector.broadcast %98 : vector<1x64xf32> to vector<8x64xf32>
    %100 = arith.mulf %94, %99 : vector<8x64xf32>
    %cst_37 = arith.constant dense<0.000000e+00> : vector<8xf32>
    %101 = vector.multi_reduction <add>, %100, %cst_37 [1] : vector<8x64xf32> to vector<8xf32>
    %102 = vector.shape_cast %101 : vector<8xf32> to vector<8x1xf32>
    %103 = tpu.transpose %100, [1, 0] : vector<8x64xf32> -> vector<64x8xf32>
    %cst_38 = arith.constant dense<0.000000e+00> : vector<128x8xf32>
    %104 = tpu.matmul %88, %103, %cst_38 {dimension_numbers = #tpu.dot_dimension_numbers<[1], [0], [0], [1], [0, 0, 1, 1], [], []>} : vector<128x64xf32>, vector<64x8xf32>, vector<128x8xf32> -> vector<128x8xf32>
    %105 = tpu.transpose %104, [1, 0] : vector<128x8xf32> -> vector<8x128xf32>
    %106 = vector.broadcast %102 : vector<8x1xf32> to vector<8x128xf32>
    %107 = arith.mulf %3, %106 : vector<8x128xf32>
    %108 = arith.subf %105, %107 : vector<8x128xf32>
    %109 = arith.mulf %108, %108 : vector<8x128xf32>
    %cst_39 = arith.constant dense<0.000000e+00> : vector<8xf32>
    %110 = vector.multi_reduction <add>, %109, %cst_39 [1] : vector<8x128xf32> to vector<8xf32>
    %111 = vector.shape_cast %110 : vector<8xf32> to vector<8x1xf32>
    %cst_40 = arith.constant 1.000000e-24 : f32
    %112 = vector.broadcast %cst_40 : f32 to vector<8x1xf32>
    %113 = arith.maximumf %111, %112 : vector<8x1xf32>
    %114 = math.rsqrt %113 : vector<8x1xf32>
    %115 = vector.broadcast %114 : vector<8x1xf32> to vector<8x128xf32>
    %116 = arith.mulf %108, %115 : vector<8x128xf32>
    %117 = arith.mulf %116, %116 : vector<8x128xf32>
    %cst_41 = arith.constant dense<0.000000e+00> : vector<8xf32>
    %118 = vector.multi_reduction <add>, %117, %cst_41 [1] : vector<8x128xf32> to vector<8xf32>
    %119 = vector.shape_cast %118 : vector<8xf32> to vector<8x1xf32>
    %cst_42 = arith.constant dense<0.000000e+00> : vector<1xf32>
    %120 = vector.multi_reduction <add>, %119, %cst_42 [0] : vector<8x1xf32> to vector<1xf32>
    %121 = vector.shape_cast %120 : vector<1xf32> to vector<1x1xf32>
    %cst_43 = arith.constant 1.000000e-24 : f32
    %122 = vector.broadcast %cst_43 : f32 to vector<1x1xf32>
    %123 = arith.maximumf %121, %122 : vector<1x1xf32>
    %124 = math.rsqrt %123 : vector<1x1xf32>
    %125 = vector.broadcast %124 : vector<1x1xf32> to vector<8x128xf32>
    %126 = arith.mulf %116, %125 : vector<8x128xf32>
    %c1_44 = arith.constant 1 : index
    %c0_45 = arith.constant 0 : index
    %c0_46 = arith.constant 0 : index
    %127 = vector.load %arg6[%c1_44, %c0_45, %c0_46] : memref<2x8x128xf32, #tpu.memory_space<vmem>>, vector<1x8x128xf32>
    %128 = vector.shape_cast %127 : vector<1x8x128xf32> to vector<8x128xf32>
    %129 = vector.shape_cast %126 : vector<8x128xf32> to vector<1x8x128xf32>
    tpu.vector_store %arg6[%c1_44, %c0_45, %c0_46], %129 {strides = array<i32>} : memref<2x8x128xf32, #tpu.memory_space<vmem>>, vector<1x8x128xf32>,
    return
  }
  func.func @transform_0(%arg0: i32) -> (i32, i32, i32) {
    %c0_i32 = arith.constant 0 : i32
    %c0_i32_0 = arith.constant 0 : i32
    %c0_i32_1 = arith.constant 0 : i32
    return %arg0, %c0_i32, %c0_i32_0 : i32, i32, i32
  }
  func.func @transform_1(%arg0: i32) -> (i32, i32) {
    %c0_i32 = arith.constant 0 : i32
    %c0_i32_0 = arith.constant 0 : i32
    %c0_i32_1 = arith.constant 0 : i32
    return %c0_i32, %c0_i32_0 : i32, i32
  }
  func.func @transform_2(%arg0: i32) -> (i32, i32) {
    %c0_i32 = arith.constant 0 : i32
    %c0_i32_0 = arith.constant 0 : i32
    %c0_i32_1 = arith.constant 0 : i32
    return %c0_i32, %c0_i32_0 : i32, i32
  }
  func.func @transform_3(%arg0: i32) -> (i32, i32) {
    %c0_i32 = arith.constant 0 : i32
    %c0_i32_0 = arith.constant 0 : i32
    %c0_i32_1 = arith.constant 0 : i32
    return %c0_i32, %c0_i32_0 : i32, i32
  }
  func.func @transform_4(%arg0: i32) -> (i32, i32) {
    %c0_i32 = arith.constant 0 : i32
    %c0_i32_0 = arith.constant 0 : i32
    %c0_i32_1 = arith.constant 0 : i32
    return %c0_i32, %c0_i32_0 : i32, i32
  }
  func.func @transform_5(%arg0: i32) -> (i32, i32, i32) {
    %c0_i32 = arith.constant 0 : i32
    %c0_i32_0 = arith.constant 0 : i32
    %c0_i32_1 = arith.constant 0 : i32
    return %arg0, %c0_i32, %c0_i32_0 : i32, i32, i32
  }
}

</mosaic_0001>

<llo_original>
// kernel: tpu_custom_call.1
$region0: #{tpu_custom_call.1}
  #allocation0 [shape = 'u32[]', space=smem, size = 0x4, offset = 0x4, fixed_abs, tag = 'smem constant byte address 0x4 - core index']
  #allocation1 [shape = 'u32[144,128]{1,0:T(1,128)}', space=vmem, size = 0x12000, scoped, tag = 'internal scratch']
  #allocation2 [shape = 'f32[1,1]{1,0:T(1,128)S(1)}', space=vmem, size = 0x200, scoped, tag = 'scoped memory for tpu_custom_call.1']
  %s0 = inlined_call_operand.vmem [shape: bf16[4,128,64], index: 0, kind: input, shape index: {}]
  %s1 = inlined_call_operand.vmem [shape: f32[128,1], index: 1, kind: input, shape index: {}]
  %s2 = inlined_call_operand.<no memory space> [shape: f32[1,1], index: 2, kind: input, shape index: {}]
  %s3 = inlined_call_operand.vmem [shape: f32[8,128], index: 3, kind: input, shape index: {}]
  %s4 = inlined_call_operand.vmem [shape: f32[8,128], index: 4, kind: input, shape index: {}]
  %s5 = inlined_call_operand.hbm [shape: f32[4,8,128], index: 5, kind: output, shape index: {}]
  %s6 = sld [smem:[#allocation0]]
  $region53: #{tpu_custom_call.1} parent=0
    _
  %s8 = ssub.s32 1, %s6
  %s9 = scalar_select 0, %s8, %s6
  %v10 = vstv %s2
  %11 = vst [vmem:[#allocation2] sm:$0x1] %v10
  $region1: #{tpu_custom_call.1} parent=0
    #allocation3 [shape = 'u8[16384]{0}', space=vmem, size = 0x4000, scoped, tag = 'output window, operand 0']
    #allocation4 [shape = 's32[2]{0}', space=sflag, size = 0x8, scoped, tag = 'scoped memory for tpu_custom_call.1']
    %12 = vsyncpa [#allocation4], 0
    %s13 = scalar_lea.sflag [#allocation4], 1
    %14 = vsyncpa %s13, 0
    loop: start=0, step=1, limit=4
    $region2: #{tpu_custom_call.1} parent=1 // loop_pre_header
      _
    $region3: #{tpu_custom_call.1} parent=1 // loop_header
      %s16 = sphi 0, %s20
      %p17 = scmp.ge.s32.totalorder %s16, 4
      %s26 = sphi 0, %s28
      %s29 = sphi 0, %s26
      %s30 = sphi 0, %s29
      %s46 = sphi 0, %s30
      %s50 = sphi 0, %s50
      %s52 = sphi 0, %s50
      %s53 = sphi 0, %s52
      %s67 = sphi 0, %s53
      %s71 = sphi 0, %s71
      %s73 = sphi 0, %s71
      %s74 = sphi 0, %s73
      %s88 = sphi 0, %s74
      %s92 = sphi 0, %s92
      %s94 = sphi 0, %s92
      %s95 = sphi 0, %s94
      %s109 = sphi 0, %s95
      %s113 = sphi 0, %s113
      %s115 = sphi 0, %s113
      %s116 = sphi 0, %s115
      %s130 = sphi 0, %s116
      %s136 = sphi 0, %s138
      %s139 = sphi 0, %s136
      %s140 = sphi 0, %s139
      %s156 = sphi 0, %s140
    $region4: #{tpu_custom_call.1} parent=1 // loop_header_branch
      %19 = sbr.rel (%p17) target = $region8
    $region5: #{tpu_custom_call.1} parent=1 // loop_body
      %s21 = ssub.s32 %s16, 1
      %s22 = ssub.s32 %s16, 2
      %s23 = sadd.s32 %s16, 1
      %s24 = ssub.s32 %s16, %s23
      %p25 = scmp.eq.s32.totalorder %s24, 0
      %s27 = sadd.s32 %s26, 1
      %s28 = scalar_select %p25, %s26, %s27
      %p31 = pneg %p25
      %p32 = scmp.eq.s32.totalorder %s16, 1
      %p33 = por %p31, %p32
      %p34 = scmp.ne.s32.totalorder %s26, %s29
      %p35 = scmp.eq.s32.totalorder %s16, 0
      %p36 = por %p34, %p35
      %p37 = scmp.ne.s32.totalorder %s26, %s29
      %p38 = scmp.eq.s32.totalorder %s21, 1
      %p39 = por %p37, %p38
      %p40 = scmp.ne.s32.totalorder %s29, %s30
      %p41 = scmp.eq.s32.totalorder %s21, 0
      %p42 = por %p40, %p41
      %p43 = scmp.ne.s32.totalorder %s29, %s30
      %p44 = scmp.eq.s32.totalorder %s22, 1
      %p45 = por %p43, %p44
      %p47 = scmp.ne.s32.totalorder %s30, %s46
      %p48 = scmp.eq.s32.totalorder %s22, 0
      %p49 = por %p47, %p48
      %s51 = sadd.s32 %s50, 1
      %p54 = scmp.eq.s32.totalorder %s16, 1
      %p55 = scmp.ne.s32.totalorder %s50, %s52
      %p56 = scmp.eq.s32.totalorder %s16, 0
      %p57 = por %p55, %p56
      %p58 = scmp.ne.s32.totalorder %s50, %s52
      %p59 = scmp.eq.s32.totalorder %s21, 1
      %p60 = por %p58, %p59
      %p61 = scmp.ne.s32.totalorder %s52, %s53
      %p62 = scmp.eq.s32.totalorder %s21, 0
      %p63 = por %p61, %p62
      %p64 = scmp.ne.s32.totalorder %s52, %s53
      %p65 = scmp.eq.s32.totalorder %s22, 1
      %p66 = por %p64, %p65
      %p68 = scmp.ne.s32.totalorder %s53, %s67
      %p69 = scmp.eq.s32.totalorder %s22, 0
      %p70 = por %p68, %p69
      %s72 = sadd.s32 %s71, 1
      %p75 = scmp.eq.s32.totalorder %s16, 1
      %p76 = scmp.ne.s32.totalorder %s71, %s73
      %p77 = scmp.eq.s32.totalorder %s16, 0
      %p78 = por %p76, %p77
      %p79 = scmp.ne.s32.totalorder %s71, %s73
      %p80 = scmp.eq.s32.totalorder %s21, 1
      %p81 = por %p79, %p80
      %p82 = scmp.ne.s32.totalorder %s73, %s74
      %p83 = scmp.eq.s32.totalorder %s21, 0
      %p84 = por %p82, %p83
      %p85 = scmp.ne.s32.totalorder %s73, %s74
      %p86 = scmp.eq.s32.totalorder %s22, 1
      %p87 = por %p85, %p86
      %p89 = scmp.ne.s32.totalorder %s74, %s88
      %p90 = scmp.eq.s32.totalorder %s22, 0
      %p91 = por %p89, %p90
      %s93 = sadd.s32 %s92, 1
      %p96 = scmp.eq.s32.totalorder %s16, 1
      %p97 = scmp.ne.s32.totalorder %s92, %s94
      %p98 = scmp.eq.s32.totalorder %s16, 0
      %p99 = por %p97, %p98
      %p100 = scmp.ne.s32.totalorder %s92, %s94
      %p101 = scmp.eq.s32.totalorder %s21, 1
      %p102 = por %p100, %p101
      %p103 = scmp.ne.s32.totalorder %s94, %s95
      %p104 = scmp.eq.s32.totalorder %s21, 0
      %p105 = por %p103, %p104
      %p106 = scmp.ne.s32.totalorder %s94, %s95
      %p107 = scmp.eq.s32.totalorder %s22, 1
      %p108 = por %p106, %p107
      %p110 = scmp.ne.s32.totalorder %s95, %s109
      %p111 = scmp.eq.s32.totalorder %s22, 0
      %p112 = por %p110, %p111
      %s114 = sadd.s32 %s113, 1
      %p117 = scmp.eq.s32.totalorder %s16, 1
      %p118 = scmp.ne.s32.totalorder %s113, %s115
      %p119 = scmp.eq.s32.totalorder %s16, 0
      %p120 = por %p118, %p119
      %p121 = scmp.ne.s32.totalorder %s113, %s115
      %p122 = scmp.eq.s32.totalorder %s21, 1
      %p123 = por %p121, %p122
      %p124 = scmp.ne.s32.totalorder %s115, %s116
      %p125 = scmp.eq.s32.totalorder %s21, 0
      %p126 = por %p124, %p125
      %p127 = scmp.ne.s32.totalorder %s115, %s116
      %p128 = scmp.eq.s32.totalorder %s22, 1
      %p129 = por %p127, %p128
      %p131 = scmp.ne.s32.totalorder %s116, %s130
      %p132 = scmp.eq.s32.totalorder %s22, 0
      %p133 = por %p131, %p132
      %s134 = ssub.s32 %s16, %s23
      %p135 = scmp.eq.s32.totalorder %s134, 0
      %s137 = sadd.s32 %s136, 1
      %s138 = scalar_select %p135, %s136, %s137
      %p141 = pneg %p135
      %p142 = scmp.eq.s32.totalorder %s16, 1
      %p143 = por %p141, %p142
      %p144 = scmp.ne.s32.totalorder %s136, %s139
      %p145 = scmp.eq.s32.totalorder %s16, 0
      %p146 = por %p144, %p145
      %p147 = scmp.ne.s32.totalorder %s136, %s139
      %p148 = scmp.eq.s32.totalorder %s21, 1
      %p149 = por %p147, %p148
      %p150 = scmp.ne.s32.totalorder %s139, %s140
      %p151 = scmp.eq.s32.totalorder %s21, 0
      %p152 = por %p150, %p151
      %p153 = scmp.ne.s32.totalorder %s139, %s140
      %p154 = scmp.eq.s32.totalorder %s22, 1
      %p155 = por %p153, %p154
      %p157 = scmp.ne.s32.totalorder %s140, %s156
      %p158 = scmp.eq.s32.totalorder %s22, 0
      %p159 = por %p157, %p158
      %p160 = scmp.le.s32.totalorder 1, %s16
      %p161 = scmp.lt.s32.totalorder %s16, 3
      %p162 = pnand %p160, %p161
      %p163 = pneg %p162
      // Predicated region
      $region9: #{tpu_custom_call.1} parent=5 // pred_check
        _
      $region10: #{tpu_custom_call.1} parent=5 // pred_check_branch
        %165 = sbr.rel (%p162) target = $region12
      $region11: #{tpu_custom_call.1} parent=5 // pred_region
        %s166 = ssub.s32 %s16, 1
        // Predicated region
        $region13: #{tpu_custom_call.1} parent=11 // pred_check
          %p167 = pneg %p63
        $region14: #{tpu_custom_call.1} parent=11 // pred_check_branch
          %169 = sbr.rel (%p167) target = $region16
        $region15: #{tpu_custom_call.1} parent=11 // pred_region
          _
        $region16: #{tpu_custom_call.1} parent=11 // pred_fallthru
          _
        // Predicated region
        $region17: #{tpu_custom_call.1} parent=11 // pred_check
          %p170 = pneg %p84
        $region18: #{tpu_custom_call.1} parent=11 // pred_check_branch
          %172 = sbr.rel (%p170) target = $region20
        $region19: #{tpu_custom_call.1} parent=11 // pred_region
          _
        $region20: #{tpu_custom_call.1} parent=11 // pred_fallthru
          _
        // Predicated region
        $region21: #{tpu_custom_call.1} parent=11 // pred_check
          %p173 = pneg %p105
        $region22: #{tpu_custom_call.1} parent=11 // pred_check_branch
          %175 = sbr.rel (%p173) target = $region24
        $region23: #{tpu_custom_call.1} parent=11 // pred_region
          _
        $region24: #{tpu_custom_call.1} parent=11 // pred_fallthru
          _
        // Predicated region
        $region25: #{tpu_custom_call.1} parent=11 // pred_check
          %p176 = pneg %p126
        $region26: #{tpu_custom_call.1} parent=11 // pred_check_branch
          %178 = sbr.rel (%p176) target = $region28
        $region27: #{tpu_custom_call.1} parent=11 // pred_region
          _
        $region28: #{tpu_custom_call.1} parent=11 // pred_fallthru
          _
      $region12: #{tpu_custom_call.1} parent=5 // pred_fallthru
        _
      %p179 = scmp.lt.s32.totalorder %s16, 2
      // Predicated region
      $region29: #{tpu_custom_call.1} parent=5 // pred_check
        %p180 = pneg %p179
      $region30: #{tpu_custom_call.1} parent=5 // pred_check_branch
        %182 = sbr.rel (%p180) target = $region32
      $region31: #{tpu_custom_call.1} parent=5 // pred_region
        // Predicated region
        $region33: #{tpu_custom_call.1} parent=31 // pred_check
          %p183 = pneg %p36
        $region34: #{tpu_custom_call.1} parent=31 // pred_check_branch
          %185 = sbr.rel (%p183) target = $region36
        $region35: #{tpu_custom_call.1} parent=31 // pred_region
          %s186 = smul.u32 2, %s16
          %p187 = scmp.lt.s32.totalorder %s186, 3
          %s188 = scalar_select %p187, %s186, 3
          %s189 = smul.addr %s188, 16
          %s190 = smul.addr %s189, 4
          %s191 = scalar_lea.vmem %s0, %s190
          %s192 = smul.u32 2, %s16
        $region36: #{tpu_custom_call.1} parent=31 // pred_fallthru
          _
      $region32: #{tpu_custom_call.1} parent=5 // pred_fallthru
        _
      %p193 = scmp.le.s32.totalorder 1, %s16
      %p194 = scmp.lt.s32.totalorder %s16, 3
      %p195 = pnand %p193, %p194
      %p196 = pneg %p195
      // Predicated region
      $region37: #{tpu_custom_call.1} parent=5 // pred_check
        _
      $region38: #{tpu_custom_call.1} parent=5 // pred_check_branch
        %198 = sbr.rel (%p195) target = $region40
      $region39: #{tpu_custom_call.1} parent=5 // pred_region
        %s199 = ssub.s32 %s16, 1
        %s200 = smul.u32 2, %s21
        %p201 = scmp.lt.s32.totalorder %s200, 3
        %s202 = scalar_select %p201, %s200, 3
        %s203 = smul.addr %s202, 16
        %s204 = smul.addr %s203, 4
        %s205 = scalar_lea.vmem %s0, %s204
        %p206 = pneg %p42
        %p207 = pneg %p39
        %p208 = pneg %p63
        %p209 = pneg %p60
        %p210 = pneg %p84
        %p211 = pneg %p81
        %p212 = pneg %p105
        %p213 = pneg %p102
        %p214 = pneg %p126
        %p215 = pneg %p123
        %p216 = pneg %p152
        %p217 = pneg %p149
        %s218 = sand.u32 %s139, 1
        %s219 = scalar_lea.sflag [#allocation4], %s218
        %s220 = sand.u32 %s139, 1
        %s221 = smul.addr %s220, 16
        %s222 = scalar_lea.vmem [#allocation3], %s221
        %s223 = smul.u32 2, %s21
        %p224 = scmp.lt.s32.totalorder %s223, 3
        %s225 = scalar_select %p224, %s223, 3
        %s226 = smul.addr %s225, 16
        %s227 = smul.addr %s226, 4
        %s228 = scalar_lea.vmem %s0, %s227
        %s229 = smul.u32 2, %s21
        %s230 = smul.u32 2, %s21
        %v231 = vld [vmem:[%s1] sm:$0xff]
        %v232 = vld [vmem:[%s1 + $0x8] sm:$0xff]
        %v233 = vld [vmem:[%s1 + $0x10] sm:$0xff]
        %v234 = vld [vmem:[%s1 + $0x18] sm:$0xff]
        %v235 = vld [vmem:[%s1 + $0x20] sm:$0xff]
        %v236 = vld [vmem:[%s1 + $0x28] sm:$0xff]
        %v237 = vld [vmem:[%s1 + $0x30] sm:$0xff]
        %v238 = vld [vmem:[%s1 + $0x38] sm:$0xff]
        %v239 = vld [vmem:[%s1 + $0x40] sm:$0xff]
        %v240 = vld [vmem:[%s1 + $0x48] sm:$0xff]
        %v241 = vld [vmem:[%s1 + $0x50] sm:$0xff]
        %v242 = vld [vmem:[%s1 + $0x58] sm:$0xff]
        %v243 = vld [vmem:[%s1 + $0x60] sm:$0xff]
        %v244 = vld [vmem:[%s1 + $0x68] sm:$0xff]
        %v245 = vld [vmem:[%s1 + $0x70] sm:$0xff]
        %v246 = vld [vmem:[%s1 + $0x78] sm:$0xff]
        %v247 = vld [vmem:[#allocation2] sm:$0x1]
        %v248 = vld [vmem:[%s3] sm:$0xff]
        %v249 = vld [vmem:[%s4] sm:$0xff]
        %v250 = vld [vmem:[%s228] sm:$0xf]
        %v251 = vld [vmem:[%s228 + $0x4] sm:$0xf]
        %v252 = vld [vmem:[%s228 + $0x8] sm:$0xf]
        %v253 = vld [vmem:[%s228 + $0xc] sm:$0xf]
        %v254 = vld [vmem:[%s228 + $0x10] sm:$0xf]
        %v255 = vld [vmem:[%s228 + $0x14] sm:$0xf]
        %v256 = vld [vmem:[%s228 + $0x18] sm:$0xf]
        %v257 = vld [vmem:[%s228 + $0x1c] sm:$0xf]
        %v258 = vld [vmem:[%s228 + $0x20] sm:$0xf]
        %v259 = vld [vmem:[%s228 + $0x24] sm:$0xf]
        %v260 = vld [vmem:[%s228 + $0x28] sm:$0xf]
        %v261 = vld [vmem:[%s228 + $0x2c] sm:$0xf]
        %v262 = vld [vmem:[%s228 + $0x30] sm:$0xf]
        %v263 = vld [vmem:[%s228 + $0x34] sm:$0xf]
        %v264 = vld [vmem:[%s228 + $0x38] sm:$0xf]
        %v265 = vld [vmem:[%s228 + $0x3c] sm:$0xf]
        %v266 = vunpack.c.l.bf16 %v250
        %v267 = vunpack.c.l.bf16 %v251
        %v268 = vunpack.c.l.bf16 %v252
        %v269 = vunpack.c.l.bf16 %v253
        %v270 = vunpack.c.l.bf16 %v254
        %v271 = vunpack.c.l.bf16 %v255
        %v272 = vunpack.c.l.bf16 %v256
        %v273 = vunpack.c.l.bf16 %v257
        %v274 = vunpack.c.l.bf16 %v258
        %v275 = vunpack.c.l.bf16 %v259
        %v276 = vunpack.c.l.bf16 %v260
        %v277 = vunpack.c.l.bf16 %v261
        %v278 = vunpack.c.l.bf16 %v262
        %v279 = vunpack.c.l.bf16 %v263
        %v280 = vunpack.c.l.bf16 %v264
        %v281 = vunpack.c.l.bf16 %v265
        %v282 = vmax.f32 %v266, 0.0
        %v283 = vmax.f32 %v267, 0.0
        %v284 = vmax.f32 %v268, 0.0
        %v285 = vmax.f32 %v269, 0.0
        %v286 = vmax.f32 %v270, 0.0
        %v287 = vmax.f32 %v271, 0.0
        %v288 = vmax.f32 %v272, 0.0
        %v289 = vmax.f32 %v273, 0.0
        %v290 = vmax.f32 %v274, 0.0
        %v291 = vmax.f32 %v275, 0.0
        %v292 = vmax.f32 %v276, 0.0
        %v293 = vmax.f32 %v277, 0.0
        %v294 = vmax.f32 %v278, 0.0
        %v295 = vmax.f32 %v279, 0.0
        %v296 = vmax.f32 %v280, 0.0
        %v297 = vmax.f32 %v281, 0.0
        %299 = vset.pattern.permute.xlu0 0
        %300 = vperm.xlu0 %299, %v231
        %v301 = vpop.permute.xlu0 %300
        %304 = vset.pattern.permute.xlu0 0
        %305 = vperm.xlu0 %304, %v232
        %v306 = vpop.permute.xlu0 %305
        %309 = vset.pattern.permute.xlu0 0
        %310 = vperm.xlu0 %309, %v233
        %v311 = vpop.permute.xlu0 %310
        %314 = vset.pattern.permute.xlu0 0
        %315 = vperm.xlu0 %314, %v234
        %v316 = vpop.permute.xlu0 %315
        %319 = vset.pattern.permute.xlu0 0
        %320 = vperm.xlu0 %319, %v235
        %v321 = vpop.permute.xlu0 %320
        %324 = vset.pattern.permute.xlu0 0
        %325 = vperm.xlu0 %324, %v236
        %v326 = vpop.permute.xlu0 %325
        %329 = vset.pattern.permute.xlu0 0
        %330 = vperm.xlu0 %329, %v237
        %v331 = vpop.permute.xlu0 %330
        %334 = vset.pattern.permute.xlu0 0
        %335 = vperm.xlu0 %334, %v238
        %v336 = vpop.permute.xlu0 %335
        %339 = vset.pattern.permute.xlu0 0
        %340 = vperm.xlu0 %339, %v239
        %v341 = vpop.permute.xlu0 %340
        %344 = vset.pattern.permute.xlu0 0
        %345 = vperm.xlu0 %344, %v240
        %v346 = vpop.permute.xlu0 %345
        %349 = vset.pattern.permute.xlu0 0
        %350 = vperm.xlu0 %349, %v241
        %v351 = vpop.permute.xlu0 %350
        %354 = vset.pattern.permute.xlu0 0
        %355 = vperm.xlu0 %354, %v242
        %v356 = vpop.permute.xlu0 %355
        %359 = vset.pattern.permute.xlu0 0
        %360 = vperm.xlu0 %359, %v243
        %v361 = vpop.permute.xlu0 %360
        %364 = vset.pattern.permute.xlu0 0
        %365 = vperm.xlu0 %364, %v244
        %v366 = vpop.permute.xlu0 %365
        %369 = vset.pattern.permute.xlu0 0
        %370 = vperm.xlu0 %369, %v245
        %v371 = vpop.permute.xlu0 %370
        %374 = vset.pattern.permute.xlu0 0
        %375 = vperm.xlu0 %374, %v246
        %v376 = vpop.permute.xlu0 %375
        %v378 = vmul.f32 %v282, %v301
        %v379 = vmul.f32 %v283, %v306
        %v380 = vmul.f32 %v284, %v311
        %v381 = vmul.f32 %v285, %v316
        %v382 = vmul.f32 %v286, %v321
        %v383 = vmul.f32 %v287, %v326
        %v384 = vmul.f32 %v288, %v331
        %v385 = vmul.f32 %v289, %v336
        %v386 = vmul.f32 %v290, %v341
        %v387 = vmul.f32 %v291, %v346
        %v388 = vmul.f32 %v292, %v351
        %v389 = vmul.f32 %v293, %v356
        %v390 = vmul.f32 %v294, %v361
        %v391 = vmul.f32 %v295, %v366
        %v392 = vmul.f32 %v296, %v371
        %v393 = vmul.f32 %v297, %v376
        %vm394 = vcmask 523264
        %v395 = vsel %vm394, %v378, 0.0
        %v396 = vsel %vm394, %v379, 0.0
        %v397 = vadd.f32 %v395, %v396
        %v398 = vsel %vm394, %v380, 0.0
        %v399 = vadd.f32 %v397, %v398
        %v400 = vsel %vm394, %v381, 0.0
        %v401 = vadd.f32 %v399, %v400
        %v402 = vsel %vm394, %v382, 0.0
        %v403 = vadd.f32 %v401, %v402
        %v404 = vsel %vm394, %v383, 0.0
        %v405 = vadd.f32 %v403, %v404
        %v406 = vsel %vm394, %v384, 0.0
        %v407 = vadd.f32 %v405, %v406
        %v408 = vsel %vm394, %v385, 0.0
        %v409 = vadd.f32 %v407, %v408
        %v410 = vsel %vm394, %v386, 0.0
        %v411 = vadd.f32 %v409, %v410
        %v412 = vsel %vm394, %v387, 0.0
        %v413 = vadd.f32 %v411, %v412
        %v414 = vsel %vm394, %v388, 0.0
        %v415 = vadd.f32 %v413, %v414
        %v416 = vsel %vm394, %v389, 0.0
        %v417 = vadd.f32 %v415, %v416
        %v418 = vsel %vm394, %v390, 0.0
        %v419 = vadd.f32 %v417, %v418
        %v420 = vsel %vm394, %v391, 0.0
        %v421 = vadd.f32 %v419, %v420
        %v422 = vsel %vm394, %v392, 0.0
        %v423 = vadd.f32 %v421, %v422
        %v424 = vsel %vm394, %v393, 0.0
        %v425 = vadd.f32 %v423, %v424
        %v426 = vrot.slane %v425, 4
        %v427 = vadd.f32 %v425, %v426
        %v428 = vrot.slane %v427, 2
        %v429 = vadd.f32 %v427, %v428
        %v430 = vrot.slane %v429, 1
        %v431 = vadd.f32 %v429, %v430
        %433 = vset.pattern.permute.xlu0 0
        %434 = vperm.xlu0 %433, %v247
        %v435 = vpop.permute.xlu0 %434
        %v437 = vlaneseq
        %v438 = vshrl.u32 %v437, 7
        %v439 = vsub.s32 0, %v438
        %v440 = vrot.slane %v435, %v439
        %v441 = vadd.f32 %v431, %v440
        %v442 = vmax.f32 %v441, 0.0
        %v443 = vmul.f32 %v266, %v266
        %v444 = vmul.f32 %v267, %v267
        %v445 = vmul.f32 %v268, %v268
        %v446 = vmul.f32 %v269, %v269
        %v447 = vmul.f32 %v270, %v270
        %v448 = vmul.f32 %v271, %v271
        %v449 = vmul.f32 %v272, %v272
        %v450 = vmul.f32 %v273, %v273
        %v451 = vmul.f32 %v274, %v274
        %v452 = vmul.f32 %v275, %v275
        %v453 = vmul.f32 %v276, %v276
        %v454 = vmul.f32 %v277, %v277
        %v455 = vmul.f32 %v278, %v278
        %v456 = vmul.f32 %v279, %v279
        %v457 = vmul.f32 %v280, %v280
        %v458 = vmul.f32 %v281, %v281
        %v459 = vsel %vm394, %v443, 0.0
        %v460 = vsel %vm394, %v444, 0.0
        %v461 = vadd.f32 %v459, %v460
        %v462 = vsel %vm394, %v445, 0.0
        %v463 = vadd.f32 %v461, %v462
        %v464 = vsel %vm394, %v446, 0.0
        %v465 = vadd.f32 %v463, %v464
        %v466 = vsel %vm394, %v447, 0.0
        %v467 = vadd.f32 %v465, %v466
        %v468 = vsel %vm394, %v448, 0.0
        %v469 = vadd.f32 %v467, %v468
        %v470 = vsel %vm394, %v449, 0.0
        %v471 = vadd.f32 %v469, %v470
        %v472 = vsel %vm394, %v450, 0.0
        %v473 = vadd.f32 %v471, %v472
        %v474 = vsel %vm394, %v451, 0.0
        %v475 = vadd.f32 %v473, %v474
        %v476 = vsel %vm394, %v452, 0.0
        %v477 = vadd.f32 %v475, %v476
        %v478 = vsel %vm394, %v453, 0.0
        %v479 = vadd.f32 %v477, %v478
        %v480 = vsel %vm394, %v454, 0.0
        %v481 = vadd.f32 %v479, %v480
        %v482 = vsel %vm394, %v455, 0.0
        %v483 = vadd.f32 %v481, %v482
        %v484 = vsel %vm394, %v456, 0.0
        %v485 = vadd.f32 %v483, %v484
        %v486 = vsel %vm394, %v457, 0.0
        %v487 = vadd.f32 %v485, %v486
        %v488 = vsel %vm394, %v458, 0.0
        %v489 = vadd.f32 %v487, %v488
        %v490 = vrot.slane %v489, 4
        %v491 = vadd.f32 %v489, %v490
        %v492 = vrot.slane %v491, 2
        %v493 = vadd.f32 %v491, %v492
        %v494 = vrot.slane %v493, 1
        %v495 = vadd.f32 %v493, %v494
        %v496 = vmax.f32 %v495, 1e-24
        %v497 = vrsqrt.pop %v496
        %v498 = vmul.f32 %v497, %v442
        %v499 = vmul.f32 %v266, %v498
        %v500 = vmul.f32 %v267, %v498
        %v501 = vmul.f32 %v268, %v498
        %v502 = vmul.f32 %v269, %v498
        %v503 = vmul.f32 %v270, %v498
        %v504 = vmul.f32 %v271, %v498
        %v505 = vmul.f32 %v272, %v498
        %v506 = vmul.f32 %v273, %v498
        %v507 = vmul.f32 %v274, %v498
        %v508 = vmul.f32 %v275, %v498
        %v509 = vmul.f32 %v276, %v498
        %v510 = vmul.f32 %v277, %v498
        %v511 = vmul.f32 %v278, %v498
        %v512 = vmul.f32 %v279, %v498
        %v513 = vmul.f32 %v280, %v498
        %v514 = vmul.f32 %v281, %v498
        %515 = vmatprep.subr.mxu0 0.0
        %516 = vmatpush1.msra.mxu0 %v514
        %517 = vmatprep.subr.mxu0 0.0
        %518 = vmatpush1.msra.mxu0 %v513
        %519 = vmatprep.subr.mxu0 0.0
        %520 = vmatpush1.msra.mxu0 %v512
        %521 = vmatprep.subr.mxu0 0.0
        %522 = vmatpush1.msra.mxu0 %v511
        %523 = vmatprep.subr.mxu0 0.0
        %524 = vmatpush1.msra.mxu0 %v510
        %525 = vmatprep.subr.mxu0 0.0
        %526 = vmatpush1.msra.mxu0 %v509
        %527 = vmatprep.subr.mxu0 0.0
        %528 = vmatpush1.msra.mxu0 %v508
        %529 = vmatprep.subr.mxu0 0.0
        %530 = vmatpush1.msra.mxu0 %v507
        %531 = vmatprep.subr.mxu0 0.0
        %532 = vmatpush1.msra.mxu0 %v506
        %533 = vmatprep.subr.mxu0 0.0
        %534 = vmatpush1.msra.mxu0 %v505
        %535 = vmatprep.subr.mxu0 0.0
        %536 = vmatpush1.msra.mxu0 %v504
        %537 = vmatprep.subr.mxu0 0.0
        %538 = vmatpush1.msra.mxu0 %v503
        %539 = vmatprep.subr.mxu0 0.0
        %540 = vmatpush1.msra.mxu0 %v502
        %541 = vmatprep.subr.mxu0 0.0
        %542 = vmatpush1.msra.mxu0 %v501
        %543 = vmatprep.subr.mxu0 0.0
        %544 = vmatpush1.msra.mxu0 %v500
        %545 = vmatprep.subr.mxu0 0.0
        %546 = vmatpush1.msra.mxu0 %v499
        %547 = vmatprep.subr.mxu0 0.0
        %548 = vmatpush2.msra.mxu0 0.0
        %549 = vmatprep.subr.mxu0 0.0
        %550 = vmatpush2.msra.mxu0 0.0
        %551 = vmatprep.subr.mxu0 0.0
        %552 = vmatpush2.msra.mxu0 0.0
        %553 = vmatprep.subr.mxu0 0.0
        %554 = vmatpush2.msra.mxu0 0.0
        %555 = vmatprep.subr.mxu0 0.0
        %556 = vmatpush2.msra.mxu0 0.0
        %557 = vmatprep.subr.mxu0 0.0
        %558 = vmatpush2.msra.mxu0 0.0
        %559 = vmatprep.subr.mxu0 0.0
        %560 = vmatpush2.msra.mxu0 0.0
        %561 = vmatprep.subr.mxu0 0.0
        %562 = vmatpush2.msra.mxu0 0.0
        %563 = vmatprep.subr.mxu0 0.0
        %564 = vmatpush2.msra.mxu0 0.0
        %565 = vmatprep.subr.mxu0 0.0
        %566 = vmatpush2.msra.mxu0 0.0
        %567 = vmatprep.subr.mxu0 0.0
        %568 = vmatpush2.msra.mxu0 0.0
        %569 = vmatprep.subr.mxu0 0.0
        %570 = vmatpush2.msra.mxu0 0.0
        %571 = vmatprep.subr.mxu0 0.0
        %572 = vmatpush2.msra.mxu0 0.0
        %573 = vmatprep.subr.mxu0 0.0
        %574 = vmatpush2.msra.mxu0 0.0
        %575 = vmatprep.subr.mxu0 0.0
        %576 = vmatpush2.msra.mxu0 0.0
        %577 = vmatprep.subr.mxu0 0.0
        %578 = vmatpush2.msra.mxu0 0.0
        %579 = vmatprep.mubr.f32.mxu0 0.0
        %580 = vmatmul.mubr.f32.gmra.mxu0 %v248
        %v581 = vpop.f32.mrf.mxu0
        %v582 = vadd.f32 0.0, %v581
        %v583 = vpop.f32.mrf.mxu0
        %584 = vdwg.mxu0
        %v585 = vsel %vm394, %v582, -inf
        %v586 = vrot.slane %v585, 4
        %v587 = vmax.f32 %v585, %v586
        %v588 = vrot.slane %v587, 2
        %v589 = vmax.f32 %v587, %v588
        %v590 = vrot.slane %v589, 1
        %v591 = vmax.f32 %v589, %v590
        %v592 = vsub.f32 %v582, %v591
        %v593 = vmul.f32 %v592, 1.442695
        %v594 = vpow.pop %v593
        %v595 = vsel %vm394, %v594, 0.0
        %v596 = vrot.slane %v595, 4
        %v597 = vadd.f32 %v595, %v596
        %v598 = vrot.slane %v597, 2
        %v599 = vadd.f32 %v597, %v598
        %v600 = vrot.slane %v599, 1
        %v601 = vadd.f32 %v599, %v600
        %v602 = vrcp.pop %v601
        %v603 = vmul.f32 %v602, %v442
        %v604 = vmul.f32 %v594, %v603
        %v605 = vsel %vm394, %v604, 0.0
        %606 = vadd.xlane.f32.xlu0 %v605
        %v607 = vpop.xlane.xlu0 %606
        %v609 = vsel %vm394, %v499, 0
        %v612 = vsel %vm394, %v500, 0
        %v615 = vsel %vm394, %v501, 0
        %v618 = vsel %vm394, %v502, 0
        %v621 = vsel %vm394, %v503, 0
        %v624 = vsel %vm394, %v504, 0
        %v627 = vsel %vm394, %v505, 0
        %v630 = vsel %vm394, %v506, 0
        %v633 = vsel %vm394, %v507, 0
        %v636 = vsel %vm394, %v508, 0
        %v639 = vsel %vm394, %v509, 0
        %v642 = vsel %vm394, %v510, 0
        %v645 = vsel %vm394, %v511, 0
        %v648 = vsel %vm394, %v512, 0
        %v651 = vsel %vm394, %v513, 0
        %v654 = vsel %vm394, %v514, 0
        %v657 = vsel %vm394, %v604, 0
        %659 = vmatprep.subr.mxu0 0.0
        %660 = vmatpush1.xpose.msra.mxu0 0.0
        %661 = vmatprep.subr.mxu0 0.0
        %662 = vmatpush1.xpose.msra.mxu0 0.0
        %663 = vmatprep.subr.mxu0 0.0
        %664 = vmatpush1.xpose.msra.mxu0 0.0
        %665 = vmatprep.subr.mxu0 0.0
        %666 = vmatpush1.xpose.msra.mxu0 0.0
        %667 = vmatprep.subr.mxu0 0.0
        %668 = vmatpush1.xpose.msra.mxu0 0.0
        %669 = vmatprep.subr.mxu0 0.0
        %670 = vmatpush1.xpose.msra.mxu0 0.0
        %671 = vmatprep.subr.mxu0 0.0
        %672 = vmatpush1.xpose.msra.mxu0 0.0
        %673 = vmatprep.subr.mxu0 0.0
        %674 = vmatpush1.xpose.msra.mxu0 0.0
        %675 = vmatprep.subr.mxu0 0.0
        %676 = vmatpush1.xpose.msra.mxu0 0.0
        %677 = vmatprep.subr.mxu0 0.0
        %678 = vmatpush1.xpose.msra.mxu0 0.0
        %679 = vmatprep.subr.mxu0 0.0
        %680 = vmatpush1.xpose.msra.mxu0 0.0
        %681 = vmatprep.subr.mxu0 0.0
        %682 = vmatpush1.xpose.msra.mxu0 0.0
        %683 = vmatprep.subr.mxu0 0.0
        %684 = vmatpush1.xpose.msra.mxu0 0.0
        %685 = vmatprep.subr.mxu0 0.0
        %686 = vmatpush1.xpose.msra.mxu0 0.0
        %687 = vmatprep.subr.mxu0 0.0
        %688 = vmatpush1.xpose.msra.mxu0 0.0
        %689 = vmatprep.subr.mxu0 0.0
        %690 = vmatpush1.xpose.msra.mxu0 %v657
        %691 = vmatprep.subr.mxu0 0.0
        %692 = vmatpush2.xpose.msra.mxu0 0.0
        %693 = vmatprep.subr.mxu0 0.0
        %694 = vmatpush2.xpose.msra.mxu0 0.0
        %695 = vmatprep.subr.mxu0 0.0
        %696 = vmatpush2.xpose.msra.mxu0 0.0
        %697 = vmatprep.subr.mxu0 0.0
        %698 = vmatpush2.xpose.msra.mxu0 0.0
        %699 = vmatprep.subr.mxu0 0.0
        %700 = vmatpush2.xpose.msra.mxu0 0.0
        %701 = vmatprep.subr.mxu0 0.0
        %702 = vmatpush2.xpose.msra.mxu0 0.0
        %703 = vmatprep.subr.mxu0 0.0
        %704 = vmatpush2.xpose.msra.mxu0 0.0
        %705 = vmatprep.subr.mxu0 0.0
        %706 = vmatpush2.xpose.msra.mxu0 0.0
        %707 = vmatprep.subr.mxu0 0.0
        %708 = vmatpush2.xpose.msra.mxu0 0.0
        %709 = vmatprep.subr.mxu0 0.0
        %710 = vmatpush2.xpose.msra.mxu0 0.0
        %711 = vmatprep.subr.mxu0 0.0
        %712 = vmatpush2.xpose.msra.mxu0 0.0
        %713 = vmatprep.subr.mxu0 0.0
        %714 = vmatpush2.xpose.msra.mxu0 0.0
        %715 = vmatprep.subr.mxu0 0.0
        %716 = vmatpush2.xpose.msra.mxu0 0.0
        %717 = vmatprep.subr.mxu0 0.0
        %718 = vmatpush2.xpose.msra.mxu0 0.0
        %719 = vmatprep.subr.mxu0 0.0
        %720 = vmatpush2.xpose.msra.mxu0 0.0
        %721 = vmatprep.subr.mxu0 0.0
        %722 = vmatpush2.xpose.msra.mxu0 0.0
        %723 = vmatprep.mubr.f32.mxu0 0.0
        %724 = vmatmul.mubr.f32.gmra.mxu0 %v609
        %v725 = vpop.f32.mrf.mxu0
        %v726 = vadd.f32 0.0, %v725
        %v727 = vpop.f32.mrf.mxu0
        %728 = vmatprep.mubr.f32.mxu0 0.0
        %729 = vmatmul.mubr.f32.gmra.mxu0 %v612
        %v730 = vpop.f32.mrf.mxu0
        %v731 = vadd.f32 0.0, %v730
        %v732 = vpop.f32.mrf.mxu0
        %733 = vmatprep.mubr.f32.mxu0 0.0
        %734 = vmatmul.mubr.f32.gmra.mxu0 %v615
        %v735 = vpop.f32.mrf.mxu0
        %v736 = vadd.f32 0.0, %v735
        %v737 = vpop.f32.mrf.mxu0
        %738 = vmatprep.mubr.f32.mxu0 0.0
        %739 = vmatmul.mubr.f32.gmra.mxu0 %v618
        %v740 = vpop.f32.mrf.mxu0
        %v741 = vadd.f32 0.0, %v740
        %v742 = vpop.f32.mrf.mxu0
        %743 = vmatprep.mubr.f32.mxu0 0.0
        %744 = vmatmul.mubr.f32.gmra.mxu0 %v621
        %v745 = vpop.f32.mrf.mxu0
        %v746 = vadd.f32 0.0, %v745
        %v747 = vpop.f32.mrf.mxu0
        %748 = vmatprep.mubr.f32.mxu0 0.0
        %749 = vmatmul.mubr.f32.gmra.mxu0 %v624
        %v750 = vpop.f32.mrf.mxu0
        %v751 = vadd.f32 0.0, %v750
        %v752 = vpop.f32.mrf.mxu0
        %753 = vmatprep.mubr.f32.mxu0 0.0
        %754 = vmatmul.mubr.f32.gmra.mxu0 %v627
        %v755 = vpop.f32.mrf.mxu0
        %v756 = vadd.f32 0.0, %v755
        %v757 = vpop.f32.mrf.mxu0
        %758 = vmatprep.mubr.f32.mxu0 0.0
        %759 = vmatmul.mubr.f32.gmra.mxu0 %v630
        %v760 = vpop.f32.mrf.mxu0
        %v761 = vadd.f32 0.0, %v760
        %v762 = vpop.f32.mrf.mxu0
        %763 = vmatprep.mubr.f32.mxu0 0.0
        %764 = vmatmul.mubr.f32.gmra.mxu0 %v633
        %v765 = vpop.f32.mrf.mxu0
        %v766 = vadd.f32 0.0, %v765
        %v767 = vpop.f32.mrf.mxu0
        %768 = vmatprep.mubr.f32.mxu0 0.0
        %769 = vmatmul.mubr.f32.gmra.mxu0 %v636
        %v770 = vpop.f32.mrf.mxu0
        %v771 = vadd.f32 0.0, %v770
        %v772 = vpop.f32.mrf.mxu0
        %773 = vmatprep.mubr.f32.mxu0 0.0
        %774 = vmatmul.mubr.f32.gmra.mxu0 %v639
        %v775 = vpop.f32.mrf.mxu0
        %v776 = vadd.f32 0.0, %v775
        %v777 = vpop.f32.mrf.mxu0
        %778 = vmatprep.mubr.f32.mxu0 0.0
        %779 = vmatmul.mubr.f32.gmra.mxu0 %v642
        %v780 = vpop.f32.mrf.mxu0
        %v781 = vadd.f32 0.0, %v780
        %v782 = vpop.f32.mrf.mxu0
        %783 = vmatprep.mubr.f32.mxu0 0.0
        %784 = vmatmul.mubr.f32.gmra.mxu0 %v645
        %v785 = vpop.f32.mrf.mxu0
        %v786 = vadd.f32 0.0, %v785
        %v787 = vpop.f32.mrf.mxu0
        %788 = vmatprep.mubr.f32.mxu0 0.0
        %789 = vmatmul.mubr.f32.gmra.mxu0 %v648
        %v790 = vpop.f32.mrf.mxu0
        %v791 = vadd.f32 0.0, %v790
        %v792 = vpop.f32.mrf.mxu0
        %793 = vmatprep.mubr.f32.mxu0 0.0
        %794 = vmatmul.mubr.f32.gmra.mxu0 %v651
        %v795 = vpop.f32.mrf.mxu0
        %v796 = vadd.f32 0.0, %v795
        %v797 = vpop.f32.mrf.mxu0
        %798 = vmatprep.mubr.f32.mxu0 0.0
        %799 = vmatmul.mubr.f32.gmra.mxu0 %v654
        %v800 = vpop.f32.mrf.mxu0
        %v801 = vadd.f32 0.0, %v800
        %v802 = vpop.f32.mrf.mxu0
        %803 = vdwg.mxu0
        %804 = vxpose.xlu0.b32.start [1/16] %v726, 128
        %805 = vxpose.xlu0.b32.cont [2/16] %v731, 128
        %806 = vxpose.xlu0.b32.cont [3/16] %v736, 128
        %807 = vxpose.xlu0.b32.cont [4/16] %v741, 128
        %808 = vxpose.xlu0.b32.cont [5/16] %v746, 128
        %809 = vxpose.xlu0.b32.cont [6/16] %v751, 128
        %810 = vxpose.xlu0.b32.cont [7/16] %v756, 128
        %811 = vxpose.xlu0.b32.cont [8/16] %v761, 128
        %812 = vxpose.xlu0.b32.cont [9/16] %v766, 128
        %813 = vxpose.xlu0.b32.cont [10/16] %v771, 128
        %814 = vxpose.xlu0.b32.cont [11/16] %v776, 128
        %815 = vxpose.xlu0.b32.cont [12/16] %v781, 128
        %816 = vxpose.xlu0.b32.cont [13/16] %v786, 128
        %817 = vxpose.xlu0.b32.cont [14/16] %v791, 128
        %818 = vxpose.xlu0.b32.cont [15/16] %v796, 128
        %819 = vxpose.xlu0.b32.end [16/16] %v801, 128
        %v820 = vpop.trf.xlu0
        %v821 = vpop.trf.xlu0
        %v822 = vpop.trf.xlu0
        %v823 = vpop.trf.xlu0
        %v824 = vpop.trf.xlu0
        %v825 = vpop.trf.xlu0
        %v826 = vpop.trf.xlu0
        %v827 = vpop.trf.xlu0
        %v828 = vpop.trf.xlu0
        %v829 = vpop.trf.xlu0
        %v830 = vpop.trf.xlu0
        %v831 = vpop.trf.xlu0
        %v832 = vpop.trf.xlu0
        %v833 = vpop.trf.xlu0
        %v834 = vpop.trf.xlu0
        %v835 = vpop.trf.xlu0
        %v836 = vmul.f32 %v249, %v607
        %v837 = vsub.f32 %v820, %v836
        %v838 = vmul.f32 %v837, %v837
        %839 = vadd.xlane.f32.xlu0 %v838
        %v840 = vpop.xlane.xlu0 %839
        %v841 = vmax.f32 %v840, 1e-24
        %v842 = vrsqrt.pop %v841
        %v843 = vmul.f32 %v837, %v842
        %v844 = vmul.f32 %v843, %v843
        %845 = vadd.xlane.f32.xlu0 %v844
        %v846 = vpop.xlane.xlu0 %845
        %v847 = vrot.slane %v846, 4
        %v848 = vadd.f32 %v846, %v847
        %v849 = vrot.slane %v848, 2
        %v850 = vadd.f32 %v848, %v849
        %v851 = vrot.slane %v850, 1
        %v852 = vadd.f32 %v850, %v851
        %v853 = vmax.f32 %v852, 1e-24
        %v854 = vrsqrt.pop %v853
        %v855 = vmul.f32 %v843, %v854
        %856 = vst [vmem:[%s222] sm:$0xff] %v855
        %s857 = scalar_lea.vmem %s228, 64
        %v858 = vld [vmem:[%s857] sm:$0xf]
        %v859 = vld [vmem:[%s857 + $0x4] sm:$0xf]
        %v860 = vld [vmem:[%s857 + $0x8] sm:$0xf]
        %v861 = vld [vmem:[%s857 + $0xc] sm:$0xf]
        %v862 = vld [vmem:[%s857 + $0x10] sm:$0xf]
        %v863 = vld [vmem:[%s857 + $0x14] sm:$0xf]
        %v864 = vld [vmem:[%s857 + $0x18] sm:$0xf]
        %v865 = vld [vmem:[%s857 + $0x1c] sm:$0xf]
        %v866 = vld [vmem:[%s857 + $0x20] sm:$0xf]
        %v867 = vld [vmem:[%s857 + $0x24] sm:$0xf]
        %v868 = vld [vmem:[%s857 + $0x28] sm:$0xf]
        %v869 = vld [vmem:[%s857 + $0x2c] sm:$0xf]
        %v870 = vld [vmem:[%s857 + $0x30] sm:$0xf]
        %v871 = vld [vmem:[%s857 + $0x34] sm:$0xf]
        %v872 = vld [vmem:[%s857 + $0x38] sm:$0xf]
        %v873 = vld [vmem:[%s857 + $0x3c] sm:$0xf]
        %v874 = vunpack.c.l.bf16 %v858
        %v875 = vunpack.c.l.bf16 %v859
        %v876 = vunpack.c.l.bf16 %v860
        %v877 = vunpack.c.l.bf16 %v861
        %v878 = vunpack.c.l.bf16 %v862
        %v879 = vunpack.c.l.bf16 %v863
        %v880 = vunpack.c.l.bf16 %v864
        %v881 = vunpack.c.l.bf16 %v865
        %v882 = vunpack.c.l.bf16 %v866
        %v883 = vunpack.c.l.bf16 %v867
        %v884 = vunpack.c.l.bf16 %v868
        %v885 = vunpack.c.l.bf16 %v869
        %v886 = vunpack.c.l.bf16 %v870
        %v887 = vunpack.c.l.bf16 %v871
        %v888 = vunpack.c.l.bf16 %v872
        %v889 = vunpack.c.l.bf16 %v873
        %v890 = vmax.f32 %v874, 0.0
        %v891 = vmax.f32 %v875, 0.0
        %v892 = vmax.f32 %v876, 0.0
        %v893 = vmax.f32 %v877, 0.0
        %v894 = vmax.f32 %v878, 0.0
        %v895 = vmax.f32 %v879, 0.0
        %v896 = vmax.f32 %v880, 0.0
        %v897 = vmax.f32 %v881, 0.0
        %v898 = vmax.f32 %v882, 0.0
        %v899 = vmax.f32 %v883, 0.0
        %v900 = vmax.f32 %v884, 0.0
        %v901 = vmax.f32 %v885, 0.0
        %v902 = vmax.f32 %v886, 0.0
        %v903 = vmax.f32 %v887, 0.0
        %v904 = vmax.f32 %v888, 0.0
        %v905 = vmax.f32 %v889, 0.0
        %v906 = vmul.f32 %v890, %v301
        %v907 = vmul.f32 %v891, %v306
        %v908 = vmul.f32 %v892, %v311
        %v909 = vmul.f32 %v893, %v316
        %v910 = vmul.f32 %v894, %v321
        %v911 = vmul.f32 %v895, %v326
        %v912 = vmul.f32 %v896, %v331
        %v913 = vmul.f32 %v897, %v336
        %v914 = vmul.f32 %v898, %v341
        %v915 = vmul.f32 %v899, %v346
        %v916 = vmul.f32 %v900, %v351
        %v917 = vmul.f32 %v901, %v356
        %v918 = vmul.f32 %v902, %v361
        %v919 = vmul.f32 %v903, %v366
        %v920 = vmul.f32 %v904, %v371
        %v921 = vmul.f32 %v905, %v376
        %v922 = vsel %vm394, %v906, 0.0
        %v923 = vsel %vm394, %v907, 0.0
        %v924 = vadd.f32 %v922, %v923
        %v925 = vsel %vm394, %v908, 0.0
        %v926 = vadd.f32 %v924, %v925
        %v927 = vsel %vm394, %v909, 0.0
        %v928 = vadd.f32 %v926, %v927
        %v929 = vsel %vm394, %v910, 0.0
        %v930 = vadd.f32 %v928, %v929
        %v931 = vsel %vm394, %v911, 0.0
        %v932 = vadd.f32 %v930, %v931
        %v933 = vsel %vm394, %v912, 0.0
        %v934 = vadd.f32 %v932, %v933
        %v935 = vsel %vm394, %v913, 0.0
        %v936 = vadd.f32 %v934, %v935
        %v937 = vsel %vm394, %v914, 0.0
        %v938 = vadd.f32 %v936, %v937
        %v939 = vsel %vm394, %v915, 0.0
        %v940 = vadd.f32 %v938, %v939
        %v941 = vsel %vm394, %v916, 0.0
        %v942 = vadd.f32 %v940, %v941
        %v943 = vsel %vm394, %v917, 0.0
        %v944 = vadd.f32 %v942, %v943
        %v945 = vsel %vm394, %v918, 0.0
        %v946 = vadd.f32 %v944, %v945
        %v947 = vsel %vm394, %v919, 0.0
        %v948 = vadd.f32 %v946, %v947
        %v949 = vsel %vm394, %v920, 0.0
        %v950 = vadd.f32 %v948, %v949
        %v951 = vsel %vm394, %v921, 0.0
        %v952 = vadd.f32 %v950, %v951
        %v953 = vrot.slane %v952, 4
        %v954 = vadd.f32 %v952, %v953
        %v955 = vrot.slane %v954, 2
        %v956 = vadd.f32 %v954, %v955
        %v957 = vrot.slane %v956, 1
        %v958 = vadd.f32 %v956, %v957
        %v959 = vadd.f32 %v958, %v440
        %v960 = vmax.f32 %v959, 0.0
        %v961 = vmul.f32 %v874, %v874
        %v962 = vmul.f32 %v875, %v875
        %v963 = vmul.f32 %v876, %v876
        %v964 = vmul.f32 %v877, %v877
        %v965 = vmul.f32 %v878, %v878
        %v966 = vmul.f32 %v879, %v879
        %v967 = vmul.f32 %v880, %v880
        %v968 = vmul.f32 %v881, %v881
        %v969 = vmul.f32 %v882, %v882
        %v970 = vmul.f32 %v883, %v883
        %v971 = vmul.f32 %v884, %v884
        %v972 = vmul.f32 %v885, %v885
        %v973 = vmul.f32 %v886, %v886
        %v974 = vmul.f32 %v887, %v887
        %v975 = vmul.f32 %v888, %v888
        %v976 = vmul.f32 %v889, %v889
        %v977 = vsel %vm394, %v961, 0.0
        %v978 = vsel %vm394, %v962, 0.0
        %v979 = vadd.f32 %v977, %v978
        %v980 = vsel %vm394, %v963, 0.0
        %v981 = vadd.f32 %v979, %v980
        %v982 = vsel %vm394, %v964, 0.0
        %v983 = vadd.f32 %v981, %v982
        %v984 = vsel %vm394, %v965, 0.0
        %v985 = vadd.f32 %v983, %v984
        %v986 = vsel %vm394, %v966, 0.0
        %v987 = vadd.f32 %v985, %v986
        %v988 = vsel %vm394, %v967, 0.0
        %v989 = vadd.f32 %v987, %v988
        %v990 = vsel %vm394, %v968, 0.0
        %v991 = vadd.f32 %v989, %v990
        %v992 = vsel %vm394, %v969, 0.0
        %v993 = vadd.f32 %v991, %v992
        %v994 = vsel %vm394, %v970, 0.0
        %v995 = vadd.f32 %v993, %v994
        %v996 = vsel %vm394, %v971, 0.0
        %v997 = vadd.f32 %v995, %v996
        %v998 = vsel %vm394, %v972, 0.0
        %v999 = vadd.f32 %v997, %v998
        %v1000 = vsel %vm394, %v973, 0.0
        %v1001 = vadd.f32 %v999, %v1000
        %v1002 = vsel %vm394, %v974, 0.0
        %v1003 = vadd.f32 %v1001, %v1002
        %v1004 = vsel %vm394, %v975, 0.0
        %v1005 = vadd.f32 %v1003, %v1004
        %v1006 = vsel %vm394, %v976, 0.0
        %v1007 = vadd.f32 %v1005, %v1006
        %v1008 = vrot.slane %v1007, 4
        %v1009 = vadd.f32 %v1007, %v1008
        %v1010 = vrot.slane %v1009, 2
        %v1011 = vadd.f32 %v1009, %v1010
        %v1012 = vrot.slane %v1011, 1
        %v1013 = vadd.f32 %v1011, %v1012
        %v1014 = vmax.f32 %v1013, 1e-24
        %v1015 = vrsqrt.pop %v1014
        %v1016 = vmul.f32 %v1015, %v960
        %v1017 = vmul.f32 %v874, %v1016
        %v1018 = vmul.f32 %v875, %v1016
        %v1019 = vmul.f32 %v876, %v1016
        %v1020 = vmul.f32 %v877, %v1016
        %v1021 = vmul.f32 %v878, %v1016
        %v1022 = vmul.f32 %v879, %v1016
        %v1023 = vmul.f32 %v880, %v1016
        %v1024 = vmul.f32 %v881, %v1016
        %v1025 = vmul.f32 %v882, %v1016
        %v1026 = vmul.f32 %v883, %v1016
        %v1027 = vmul.f32 %v884, %v1016
        %v1028 = vmul.f32 %v885, %v1016
        %v1029 = vmul.f32 %v886, %v1016
        %v1030 = vmul.f32 %v887, %v1016
        %v1031 = vmul.f32 %v888, %v1016
        %v1032 = vmul.f32 %v889, %v1016
        %1033 = vmatprep.subr.mxu0 0.0
        %1034 = vmatpush1.msra.mxu0 %v1032
        %1035 = vmatprep.subr.mxu0 0.0
        %1036 = vmatpush1.msra.mxu0 %v1031
        %1037 = vmatprep.subr.mxu0 0.0
        %1038 = vmatpush1.msra.mxu0 %v1030
        %1039 = vmatprep.subr.mxu0 0.0
        %1040 = vmatpush1.msra.mxu0 %v1029
        %1041 = vmatprep.subr.mxu0 0.0
        %1042 = vmatpush1.msra.mxu0 %v1028
        %1043 = vmatprep.subr.mxu0 0.0
        %1044 = vmatpush1.msra.mxu0 %v1027
        %1045 = vmatprep.subr.mxu0 0.0
        %1046 = vmatpush1.msra.mxu0 %v1026
        %1047 = vmatprep.subr.mxu0 0.0
        %1048 = vmatpush1.msra.mxu0 %v1025
        %1049 = vmatprep.subr.mxu0 0.0
        %1050 = vmatpush1.msra.mxu0 %v1024
        %1051 = vmatprep.subr.mxu0 0.0
        %1052 = vmatpush1.msra.mxu0 %v1023
        %1053 = vmatprep.subr.mxu0 0.0
        %1054 = vmatpush1.msra.mxu0 %v1022
        %1055 = vmatprep.subr.mxu0 0.0
        %1056 = vmatpush1.msra.mxu0 %v1021
        %1057 = vmatprep.subr.mxu0 0.0
        %1058 = vmatpush1.msra.mxu0 %v1020
        %1059 = vmatprep.subr.mxu0 0.0
        %1060 = vmatpush1.msra.mxu0 %v1019
        %1061 = vmatprep.subr.mxu0 0.0
        %1062 = vmatpush1.msra.mxu0 %v1018
        %1063 = vmatprep.subr.mxu0 0.0
        %1064 = vmatpush1.msra.mxu0 %v1017
        %1065 = vmatprep.subr.mxu0 0.0
        %1066 = vmatpush2.msra.mxu0 0.0
        %1067 = vmatprep.subr.mxu0 0.0
        %1068 = vmatpush2.msra.mxu0 0.0
        %1069 = vmatprep.subr.mxu0 0.0
        %1070 = vmatpush2.msra.mxu0 0.0
        %1071 = vmatprep.subr.mxu0 0.0
        %1072 = vmatpush2.msra.mxu0 0.0
        %1073 = vmatprep.subr.mxu0 0.0
        %1074 = vmatpush2.msra.mxu0 0.0
        %1075 = vmatprep.subr.mxu0 0.0
        %1076 = vmatpush2.msra.mxu0 0.0
        %1077 = vmatprep.subr.mxu0 0.0
        %1078 = vmatpush2.msra.mxu0 0.0
        %1079 = vmatprep.subr.mxu0 0.0
        %1080 = vmatpush2.msra.mxu0 0.0
        %1081 = vmatprep.subr.mxu0 0.0
        %1082 = vmatpush2.msra.mxu0 0.0
        %1083 = vmatprep.subr.mxu0 0.0
        %1084 = vmatpush2.msra.mxu0 0.0
        %1085 = vmatprep.subr.mxu0 0.0
        %1086 = vmatpush2.msra.mxu0 0.0
        %1087 = vmatprep.subr.mxu0 0.0
        %1088 = vmatpush2.msra.mxu0 0.0
        %1089 = vmatprep.subr.mxu0 0.0
        %1090 = vmatpush2.msra.mxu0 0.0
        %1091 = vmatprep.subr.mxu0 0.0
        %1092 = vmatpush2.msra.mxu0 0.0
        %1093 = vmatprep.subr.mxu0 0.0
        %1094 = vmatpush2.msra.mxu0 0.0
        %1095 = vmatprep.subr.mxu0 0.0
        %1096 = vmatpush2.msra.mxu0 0.0
        %1097 = vmatprep.mubr.f32.mxu0 0.0
        %1098 = vmatmul.mubr.f32.gmra.mxu0 %v248
        %v1099 = vpop.f32.mrf.mxu0
        %v1100 = vadd.f32 0.0, %v1099
        %v1101 = vpop.f32.mrf.mxu0
        %1102 = vdwg.mxu0
        %v1103 = vsel %vm394, %v1100, -inf
        %v1104 = vrot.slane %v1103, 4
        %v1105 = vmax.f32 %v1103, %v1104
        %v1106 = vrot.slane %v1105, 2
        %v1107 = vmax.f32 %v1105, %v1106
        %v1108 = vrot.slane %v1107, 1
        %v1109 = vmax.f32 %v1107, %v1108
        %v1110 = vsub.f32 %v1100, %v1109
        %v1111 = vmul.f32 %v1110, 1.442695
        %v1112 = vpow.pop %v1111
        %v1113 = vsel %vm394, %v1112, 0.0
        %v1114 = vrot.slane %v1113, 4
        %v1115 = vadd.f32 %v1113, %v1114
        %v1116 = vrot.slane %v1115, 2
        %v1117 = vadd.f32 %v1115, %v1116
        %v1118 = vrot.slane %v1117, 1
        %v1119 = vadd.f32 %v1117, %v1118
        %v1120 = vrcp.pop %v1119
        %v1121 = vmul.f32 %v1120, %v960
        %v1122 = vmul.f32 %v1112, %v1121
        %v1123 = vsel %vm394, %v1122, 0.0
        %1124 = vadd.xlane.f32.xlu0 %v1123
        %v1125 = vpop.xlane.xlu0 %1124
        %v1127 = vsel %vm394, %v1017, 0
        %v1130 = vsel %vm394, %v1018, 0
        %v1133 = vsel %vm394, %v1019, 0
        %v1136 = vsel %vm394, %v1020, 0
        %v1139 = vsel %vm394, %v1021, 0
        %v1142 = vsel %vm394, %v1022, 0
        %v1145 = vsel %vm394, %v1023, 0
        %v1148 = vsel %vm394, %v1024, 0
        %v1151 = vsel %vm394, %v1025, 0
        %v1154 = vsel %vm394, %v1026, 0
        %v1157 = vsel %vm394, %v1027, 0
        %v1160 = vsel %vm394, %v1028, 0
        %v1163 = vsel %vm394, %v1029, 0
        %v1166 = vsel %vm394, %v1030, 0
        %v1169 = vsel %vm394, %v1031, 0
        %v1172 = vsel %vm394, %v1032, 0
        %v1175 = vsel %vm394, %v1122, 0
        %1177 = vmatprep.subr.mxu0 0.0
        %1178 = vmatpush1.xpose.msra.mxu0 0.0
        %1179 = vmatprep.subr.mxu0 0.0
        %1180 = vmatpush1.xpose.msra.mxu0 0.0
        %1181 = vmatprep.subr.mxu0 0.0
        %1182 = vmatpush1.xpose.msra.mxu0 0.0
        %1183 = vmatprep.subr.mxu0 0.0
        %1184 = vmatpush1.xpose.msra.mxu0 0.0
        %1185 = vmatprep.subr.mxu0 0.0
        %1186 = vmatpush1.xpose.msra.mxu0 0.0
        %1187 = vmatprep.subr.mxu0 0.0
        %1188 = vmatpush1.xpose.msra.mxu0 0.0
        %1189 = vmatprep.subr.mxu0 0.0
        %1190 = vmatpush1.xpose.msra.mxu0 0.0
        %1191 = vmatprep.subr.mxu0 0.0
        %1192 = vmatpush1.xpose.msra.mxu0 0.0
        %1193 = vmatprep.subr.mxu0 0.0
        %1194 = vmatpush1.xpose.msra.mxu0 0.0
        %1195 = vmatprep.subr.mxu0 0.0
        %1196 = vmatpush1.xpose.msra.mxu0 0.0
        %1197 = vmatprep.subr.mxu0 0.0
        %1198 = vmatpush1.xpose.msra.mxu0 0.0
        %1199 = vmatprep.subr.mxu0 0.0
        %1200 = vmatpush1.xpose.msra.mxu0 0.0
        %1201 = vmatprep.subr.mxu0 0.0
        %1202 = vmatpush1.xpose.msra.mxu0 0.0
        %1203 = vmatprep.subr.mxu0 0.0
        %1204 = vmatpush1.xpose.msra.mxu0 0.0
        %1205 = vmatprep.subr.mxu0 0.0
        %1206 = vmatpush1.xpose.msra.mxu0 0.0
        %1207 = vmatprep.subr.mxu0 0.0
        %1208 = vmatpush1.xpose.msra.mxu0 %v1175
        %1209 = vmatprep.subr.mxu0 0.0
        %1210 = vmatpush2.xpose.msra.mxu0 0.0
        %1211 = vmatprep.subr.mxu0 0.0
        %1212 = vmatpush2.xpose.msra.mxu0 0.0
        %1213 = vmatprep.subr.mxu0 0.0
        %1214 = vmatpush2.xpose.msra.mxu0 0.0
        %1215 = vmatprep.subr.mxu0 0.0
        %1216 = vmatpush2.xpose.msra.mxu0 0.0
        %1217 = vmatprep.subr.mxu0 0.0
        %1218 = vmatpush2.xpose.msra.mxu0 0.0
        %1219 = vmatprep.subr.mxu0 0.0
        %1220 = vmatpush2.xpose.msra.mxu0 0.0
        %1221 = vmatprep.subr.mxu0 0.0
        %1222 = vmatpush2.xpose.msra.mxu0 0.0
        %1223 = vmatprep.subr.mxu0 0.0
        %1224 = vmatpush2.xpose.msra.mxu0 0.0
        %1225 = vmatprep.subr.mxu0 0.0
        %1226 = vmatpush2.xpose.msra.mxu0 0.0
        %1227 = vmatprep.subr.mxu0 0.0
        %1228 = vmatpush2.xpose.msra.mxu0 0.0
        %1229 = vmatprep.subr.mxu0 0.0
        %1230 = vmatpush2.xpose.msra.mxu0 0.0
        %1231 = vmatprep.subr.mxu0 0.0
        %1232 = vmatpush2.xpose.msra.mxu0 0.0
        %1233 = vmatprep.subr.mxu0 0.0
        %1234 = vmatpush2.xpose.msra.mxu0 0.0
        %1235 = vmatprep.subr.mxu0 0.0
        %1236 = vmatpush2.xpose.msra.mxu0 0.0
        %1237 = vmatprep.subr.mxu0 0.0
        %1238 = vmatpush2.xpose.msra.mxu0 0.0
        %1239 = vmatprep.subr.mxu0 0.0
        %1240 = vmatpush2.xpose.msra.mxu0 0.0
        %1241 = vmatprep.mubr.f32.mxu0 0.0
        %1242 = vmatmul.mubr.f32.gmra.mxu0 %v1127
        %v1243 = vpop.f32.mrf.mxu0
        %v1244 = vadd.f32 0.0, %v1243
        %v1245 = vpop.f32.mrf.mxu0
        %1246 = vmatprep.mubr.f32.mxu0 0.0
        %1247 = vmatmul.mubr.f32.gmra.mxu0 %v1130
        %v1248 = vpop.f32.mrf.mxu0
        %v1249 = vadd.f32 0.0, %v1248
        %v1250 = vpop.f32.mrf.mxu0
        %1251 = vmatprep.mubr.f32.mxu0 0.0
        %1252 = vmatmul.mubr.f32.gmra.mxu0 %v1133
        %v1253 = vpop.f32.mrf.mxu0
        %v1254 = vadd.f32 0.0, %v1253
        %v1255 = vpop.f32.mrf.mxu0
        %1256 = vmatprep.mubr.f32.mxu0 0.0
        %1257 = vmatmul.mubr.f32.gmra.mxu0 %v1136
        %v1258 = vpop.f32.mrf.mxu0
        %v1259 = vadd.f32 0.0, %v1258
        %v1260 = vpop.f32.mrf.mxu0
        %1261 = vmatprep.mubr.f32.mxu0 0.0
        %1262 = vmatmul.mubr.f32.gmra.mxu0 %v1139
        %v1263 = vpop.f32.mrf.mxu0
        %v1264 = vadd.f32 0.0, %v1263
        %v1265 = vpop.f32.mrf.mxu0
        %1266 = vmatprep.mubr.f32.mxu0 0.0
        %1267 = vmatmul.mubr.f32.gmra.mxu0 %v1142
        %v1268 = vpop.f32.mrf.mxu0
        %v1269 = vadd.f32 0.0, %v1268
        %v1270 = vpop.f32.mrf.mxu0
        %1271 = vmatprep.mubr.f32.mxu0 0.0
        %1272 = vmatmul.mubr.f32.gmra.mxu0 %v1145
        %v1273 = vpop.f32.mrf.mxu0
        %v1274 = vadd.f32 0.0, %v1273
        %v1275 = vpop.f32.mrf.mxu0
        %1276 = vmatprep.mubr.f32.mxu0 0.0
        %1277 = vmatmul.mubr.f32.gmra.mxu0 %v1148
        %v1278 = vpop.f32.mrf.mxu0
        %v1279 = vadd.f32 0.0, %v1278
        %v1280 = vpop.f32.mrf.mxu0
        %1281 = vmatprep.mubr.f32.mxu0 0.0
        %1282 = vmatmul.mubr.f32.gmra.mxu0 %v1151
        %v1283 = vpop.f32.mrf.mxu0
        %v1284 = vadd.f32 0.0, %v1283
        %v1285 = vpop.f32.mrf.mxu0
        %1286 = vmatprep.mubr.f32.mxu0 0.0
        %1287 = vmatmul.mubr.f32.gmra.mxu0 %v1154
        %v1288 = vpop.f32.mrf.mxu0
        %v1289 = vadd.f32 0.0, %v1288
        %v1290 = vpop.f32.mrf.mxu0
        %1291 = vmatprep.mubr.f32.mxu0 0.0
        %1292 = vmatmul.mubr.f32.gmra.mxu0 %v1157
        %v1293 = vpop.f32.mrf.mxu0
        %v1294 = vadd.f32 0.0, %v1293
        %v1295 = vpop.f32.mrf.mxu0
        %1296 = vmatprep.mubr.f32.mxu0 0.0
        %1297 = vmatmul.mubr.f32.gmra.mxu0 %v1160
        %v1298 = vpop.f32.mrf.mxu0
        %v1299 = vadd.f32 0.0, %v1298
        %v1300 = vpop.f32.mrf.mxu0
        %1301 = vmatprep.mubr.f32.mxu0 0.0
        %1302 = vmatmul.mubr.f32.gmra.mxu0 %v1163
        %v1303 = vpop.f32.mrf.mxu0
        %v1304 = vadd.f32 0.0, %v1303
        %v1305 = vpop.f32.mrf.mxu0
        %1306 = vmatprep.mubr.f32.mxu0 0.0
        %1307 = vmatmul.mubr.f32.gmra.mxu0 %v1166
        %v1308 = vpop.f32.mrf.mxu0
        %v1309 = vadd.f32 0.0, %v1308
        %v1310 = vpop.f32.mrf.mxu0
        %1311 = vmatprep.mubr.f32.mxu0 0.0
        %1312 = vmatmul.mubr.f32.gmra.mxu0 %v1169
        %v1313 = vpop.f32.mrf.mxu0
        %v1314 = vadd.f32 0.0, %v1313
        %v1315 = vpop.f32.mrf.mxu0
        %1316 = vmatprep.mubr.f32.mxu0 0.0
        %1317 = vmatmul.mubr.f32.gmra.mxu0 %v1172
        %v1318 = vpop.f32.mrf.mxu0
        %v1319 = vadd.f32 0.0, %v1318
        %v1320 = vpop.f32.mrf.mxu0
        %1321 = vdwg.mxu0
        %1322 = vxpose.xlu0.b32.start [1/16] %v1244, 128
        %1323 = vxpose.xlu0.b32.cont [2/16] %v1249, 128
        %1324 = vxpose.xlu0.b32.cont [3/16] %v1254, 128
        %1325 = vxpose.xlu0.b32.cont [4/16] %v1259, 128
        %1326 = vxpose.xlu0.b32.cont [5/16] %v1264, 128
        %1327 = vxpose.xlu0.b32.cont [6/16] %v1269, 128
        %1328 = vxpose.xlu0.b32.cont [7/16] %v1274, 128
        %1329 = vxpose.xlu0.b32.cont [8/16] %v1279, 128
        %1330 = vxpose.xlu0.b32.cont [9/16] %v1284, 128
        %1331 = vxpose.xlu0.b32.cont [10/16] %v1289, 128
        %1332 = vxpose.xlu0.b32.cont [11/16] %v1294, 128
        %1333 = vxpose.xlu0.b32.cont [12/16] %v1299, 128
        %1334 = vxpose.xlu0.b32.cont [13/16] %v1304, 128
        %1335 = vxpose.xlu0.b32.cont [14/16] %v1309, 128
        %1336 = vxpose.xlu0.b32.cont [15/16] %v1314, 128
        %1337 = vxpose.xlu0.b32.end [16/16] %v1319, 128
        %v1338 = vpop.trf.xlu0
        %v1339 = vpop.trf.xlu0
        %v1340 = vpop.trf.xlu0
        %v1341 = vpop.trf.xlu0
        %v1342 = vpop.trf.xlu0
        %v1343 = vpop.trf.xlu0
        %v1344 = vpop.trf.xlu0
        %v1345 = vpop.trf.xlu0
        %v1346 = vpop.trf.xlu0
        %v1347 = vpop.trf.xlu0
        %v1348 = vpop.trf.xlu0
        %v1349 = vpop.trf.xlu0
        %v1350 = vpop.trf.xlu0
        %v1351 = vpop.trf.xlu0
        %v1352 = vpop.trf.xlu0
        %v1353 = vpop.trf.xlu0
        %v1354 = vmul.f32 %v249, %v1125
        %v1355 = vsub.f32 %v1338, %v1354
        %v1356 = vmul.f32 %v1355, %v1355
        %1357 = vadd.xlane.f32.xlu0 %v1356
        %v1358 = vpop.xlane.xlu0 %1357
        %v1359 = vmax.f32 %v1358, 1e-24
        %v1360 = vrsqrt.pop %v1359
        %v1361 = vmul.f32 %v1355, %v1360
        %v1362 = vmul.f32 %v1361, %v1361
        %1363 = vadd.xlane.f32.xlu0 %v1362
        %v1364 = vpop.xlane.xlu0 %1363
        %v1365 = vrot.slane %v1364, 4
        %v1366 = vadd.f32 %v1364, %v1365
        %v1367 = vrot.slane %v1366, 2
        %v1368 = vadd.f32 %v1366, %v1367
        %v1369 = vrot.slane %v1368, 1
        %v1370 = vadd.f32 %v1368, %v1369
        %v1371 = vmax.f32 %v1370, 1e-24
        %v1372 = vrsqrt.pop %v1371
        %v1373 = vmul.f32 %v1361, %v1372
        %s1374 = scalar_lea.vmem %s222, 8 [#allocation3]
        %1375 = vst [vmem:[%s1374] sm:$0xff] %v1373
        %s1376 = sand.u32 %s139, 1
        %s1377 = scalar_lea.sflag [#allocation4], %s1376
        %s1378 = sand.u32 %s139, 1
        %s1379 = smul.addr %s1378, 16
        %s1380 = scalar_lea.vmem [#allocation3], %s1379
        // Predicated region
        $region41: #{tpu_custom_call.1} parent=39 // pred_check
          %p1381 = pneg %p149
        $region42: #{tpu_custom_call.1} parent=39 // pred_check_branch
          %1383 = sbr.rel (%p1381) target = $region44
        $region43: #{tpu_custom_call.1} parent=39 // pred_region
          %s1384 = smul.u32 2, %s21
          %s1386 = ssub.s32 256, 256
          %1387 = vsyncadd %s1377, %s1386
          %s1388 = smul.addr %s1384, 128
          %s1389 = scalar_lea.hbm %s5, %s1388
          %s1390 = sshll.u32 %s1380, 4
          %s1391 = int_to_ptr.vmem [resolvable:$true] %s1390
          %1396 = dma.vmem_to_hbm [thread:$0]  %s1391, 256, %s1389, %s1377, 128, 128, 8
        $region44: #{tpu_custom_call.1} parent=39 // pred_fallthru
          _
      $region40: #{tpu_custom_call.1} parent=5 // pred_fallthru
        _
      %p1397 = scmp.le.s32.totalorder 2, %s16
      // Predicated region
      $region45: #{tpu_custom_call.1} parent=5 // pred_check
        %p1398 = pneg %p1397
      $region46: #{tpu_custom_call.1} parent=5 // pred_check_branch
        %1400 = sbr.rel (%p1398) target = $region48
      $region47: #{tpu_custom_call.1} parent=5 // pred_region
        %s1401 = ssub.s32 %s16, 2
        // Predicated region
        $region49: #{tpu_custom_call.1} parent=47 // pred_check
          %p1402 = pneg %p155
        $region50: #{tpu_custom_call.1} parent=47 // pred_check_branch
          %1404 = sbr.rel (%p1402) target = $region52
        $region51: #{tpu_custom_call.1} parent=47 // pred_region
          %s1405 = sand.u32 %s140, 1
          %s1406 = scalar_lea.sflag [#allocation4], %s1405
          %s1407 = sand.u32 %s140, 1
          %s1408 = smul.addr %s1407, 16
          %s1409 = scalar_lea.vmem [#allocation3], %s1408
          %1410 = dma.done %s1406, 256
        $region52: #{tpu_custom_call.1} parent=47 // pred_fallthru
          _
      $region48: #{tpu_custom_call.1} parent=5 // pred_fallthru
        _
    $region6: #{tpu_custom_call.1} parent=1 // loop_footer
      %s20 = sadd.s32 1, %s16
    $region7: #{tpu_custom_call.1} parent=1 // loop_footer_branch
      %15 = sbr.rel target = $region3
    $region8: #{tpu_custom_call.1} parent=1 // loop_exit
      _
    %1411 = vsyncpa [#allocation4], 1
    %s1412 = scalar_lea.sflag [#allocation4], 1
    %1413 = vsyncpa %s1412, 1

</llo_original>
